<compile_context>
chip_gen: v6e
topology: v6e:2x2x1
jax: 0.10.0
libtpu: 0.0.40
codegen_flags: <defaults>
</compile_context>

<pallas_src>
import math

import jax
import jax.numpy as jnp
from jax.experimental import pallas as pl
from jax.experimental.pallas import tpu as pltpu

# ---- small, module-consistent shapes ----
B, S, D, H, DFF = 2, 8, 32, 4, 64
DK = D // H
BS = B * S
EPS = 1e-6
NEG = -1e9


def _layer_norm(x, alpha, bias):
    # torch LayerNormalization: alpha * (x - mean) / (std + eps) + bias,
    # where torch.std is the unbiased estimator (divide by N-1).
    mean = jnp.mean(x, axis=-1, keepdims=True)
    c = x - mean
    var = jnp.sum(c * c, axis=-1, keepdims=True) * (1.0 / (x.shape[-1] - 1))
    return alpha * c / (jnp.sqrt(var) + EPS) + bias   # exact division


def encoder_block_kernel(ln_ref, x_ref, mask_ref, wqkv_ref, wo_ref,
                         w1_ref, w2_ref, bias_ref, out_ref, attn_sc):
    # Single invocation: the whole batch is one (B*S, D) = (16, 32) slab.
    x = x_ref[...]

    a1, c1 = ln_ref[0], ln_ref[1]   # norm for residual connection 0
    a2, c2 = ln_ref[2], ln_ref[3]   # norm for residual connection 1

    # TODO(synk): dropout layers are identity here (eval-mode semantics).

    # ---- residual 0: x + MHA(norm(x)) ----
    xn = _layer_norm(x, a1, c1)

    # Fused QKV projection: one (16,32)x(32,96) MXU push for the whole batch.
    qkv = (jnp.dot(xn, wqkv_ref[...], preferred_element_type=jnp.float32)
           + bias_ref[0])                                     # (16, 96)

    # Block-diagonal additive mask bias over the folded (B*S, B*S) score matrix:
    # diagonal blocks carry the per-batch padding mask (0 / -1e9), off-diagonal
    # blocks are -1e9 so queries never attend across batch elements.
    # Head-invariant -> built once outside the head loop.
    # NOTE: fully-masked rows degrade to uniform attention (as in the reference).
    row_blocks = []
    for bi in range(B):
        blocks = []
        for bj in range(B):
            if bi == bj:
                blocks.append((mask_ref[bi] - 1.0) * 1e9)     # 0.0 / -1e9
            else:
                blocks.append(jnp.full((S, S), NEG, jnp.float32))
        row_blocks.append(jnp.concatenate(blocks, axis=1))    # (S, B*S)
    neg_bias = jnp.concatenate(row_blocks, axis=0)            # (16, 16)

    scale = 1.0 / math.sqrt(DK)
    for hd in range(H):   # static unroll; H is tiny
        q_h = qkv[:, hd * DK:(hd + 1) * DK]                   # (16, 8)
        k_h = qkv[:, D + hd * DK:D + (hd + 1) * DK]           # (16, 8)
        v_h = qkv[:, 2 * D + hd * DK:2 * D + (hd + 1) * DK]   # (16, 8)
        # One batch-merged score matmul per head; contract last dims directly
        # (no materialized transpose of k_h).
        s = jnp.einsum("qd,kd->qk", q_h, k_h,
                       preferred_element_type=jnp.float32) * scale + neg_bias
        e = jnp.exp(s - jnp.max(s, axis=-1, keepdims=True))
        p = e / jnp.sum(e, axis=-1, keepdims=True)            # exact division
        o_h = jnp.dot(p, v_h, preferred_element_type=jnp.float32)   # (16, 8)
        # Lane-place into the VMEM scratch; one fused w_o matmul follows.
        attn_sc[:, hd * DK:(hd + 1) * DK] = o_h

    attn = (jnp.dot(attn_sc[...], wo_ref[...],
                    preferred_element_type=jnp.float32) + bias_ref[1, :D])
    y = x + attn

    # ---- residual 1: y + FFN(norm(y)) ----
    yn = _layer_norm(y, a2, c2)
    h1 = jnp.maximum(
        jnp.dot(yn, w1_ref[...], preferred_element_type=jnp.float32)
        + bias_ref[2, :DFF], 0.0)
    ff = (jnp.dot(h1, w2_ref[...], preferred_element_type=jnp.float32)
          + bias_ref[3, :D])
    out_ref[...] = (y + ff).astype(out_ref.dtype)


def pack_params(params):
    """One-time layout prep, hoisted out of the per-call path (perf review):
    fuse Q/K/V weights into a single (D, 3D) matrix and pack all six bias
    vectors into one lane-0-aligned (4, 3D) slab (rows: qkv | o | ff1 | ff2)."""
    (ln, wq, bq, wk, bk, wv, bv, wo, bo, w1, b1, w2, b2) = params
    wqkv = jnp.concatenate([wq, wk, wv], axis=1)               # (D, 3D)
    bias_pack = jnp.zeros((4, 3 * D), jnp.float32)
    bias_pack = bias_pack.at[0, :].set(jnp.concatenate([bq[0], bk[0], bv[0]]))
    bias_pack = bias_pack.at[1, :D].set(bo[0])
    bias_pack = bias_pack.at[2, :DFF].set(b1[0])
    bias_pack = bias_pack.at[3, :D].set(b2[0])
    return (ln, wqkv, wo, w1, w2, bias_pack)


def encoder_block(x, mask, packed):
    ln, wqkv, wo, w1, w2, bias_pack = packed
    x2d = x.reshape(BS, D)          # free HBM reshape (metadata only)

    vmem = pl.BlockSpec(memory_space=pltpu.MemorySpace.VMEM)
    out2d = pl.pallas_call(
        encoder_block_kernel,
        out_shape=jax.ShapeDtypeStruct((BS, D), jnp.float32),
        # No grid: single step per forward; total working set is < 100 KiB,
        # so everything sits comfortably in VMEM on v5e/v6e/v7x.
        in_specs=[
            pl.BlockSpec(memory_space=pltpu.MemorySpace.SMEM),  # ln scalars
            vmem,                                               # x  (16, 32)
            vmem,                                               # mask (2, 8, 8)
            vmem,                                               # fused w_qkv
            vmem,                                               # w_o
            vmem,                                               # w1
            vmem,                                               # w2
            vmem,                                               # packed biases
        ],
        out_specs=vmem,
        scratch_shapes=[pltpu.VMEM((BS, D), jnp.float32)],      # attn output slab
    )(ln, x2d, mask, wqkv, wo, w1, w2, bias_pack)
    return out2d.reshape(B, S, D)


def encoder_block_ref(x, mask, params):
    """Pure-JAX reference of the PyTorch forward (dropout = identity)."""
    (ln, wq, bq, wk, bk, wv, bv, wo, bo, w1, b1, w2, b2) = params
    a1, c1, a2, c2 = ln[0], ln[1], ln[2], ln[3]

    def norm(t, a, c):
        m = jnp.mean(t, axis=-1, keepdims=True)
        s = jnp.std(t, axis=-1, keepdims=True, ddof=1)
        return a * (t - m) / (s + EPS) + c

    xn = norm(x, a1, c1)
    q = xn @ wq + bq[0]
    k = xn @ wk + bk[0]
    v = xn @ wv + bv[0]
    q = q.reshape(B, S, H, DK).transpose(0, 2, 1, 3)
    k = k.reshape(B, S, H, DK).transpose(0, 2, 1, 3)
    v = v.reshape(B, S, H, DK).transpose(0, 2, 1, 3)
    scores = jnp.einsum("bhqd,bhkd->bhqk", q, k) / math.sqrt(DK)
    scores = jnp.where(mask[:, None, :, :] == 0.0, -1e9, scores)
    p = jax.nn.softmax(scores, axis=-1)
    o = jnp.einsum("bhqk,bhkd->bhqd", p, v).transpose(0, 2, 1, 3).reshape(B, S, D)
    y = x + (o @ wo + bo[0])
    yn = norm(y, a2, c2)
    ff = jnp.maximum(yn @ w1 + b1[0], 0.0) @ w2 + b2[0]
    return y + ff


def init_params(key):
    ks = jax.random.split(key, 12)
    scl = 0.02
    wq = scl * jax.random.normal(ks[0], (D, D), jnp.float32)
    wk = scl * jax.random.normal(ks[1], (D, D), jnp.float32)
    wv = scl * jax.random.normal(ks[2], (D, D), jnp.float32)
    wo = scl * jax.random.normal(ks[3], (D, D), jnp.float32)
    w1 = scl * jax.random.normal(ks[4], (D, DFF), jnp.float32)
    w2 = scl * jax.random.normal(ks[5], (DFF, D), jnp.float32)
    bq = 0.01 * jax.random.normal(ks[6], (1, D), jnp.float32)
    bk = 0.01 * jax.random.normal(ks[7], (1, D), jnp.float32)
    bv = 0.01 * jax.random.normal(ks[8], (1, D), jnp.float32)
    bo = 0.01 * jax.random.normal(ks[9], (1, D), jnp.float32)
    b1 = 0.01 * jax.random.normal(ks[10], (1, DFF), jnp.float32)
    b2 = 0.01 * jax.random.normal(ks[11], (1, D), jnp.float32)
    # LayerNormalization params: [alpha0, bias0, alpha1, bias1]
    # (non-trivial values so the SMEM path is actually exercised)
    ln = jnp.array([1.1, 0.05, 0.9, -0.03], jnp.float32)
    return (ln, wq, bq, wk, bk, wv, bv, wo, bo, w1, b1, w2, b2)


if __name__ == "__main__":
    key = jax.random.PRNGKey(0)
    kx, km, kp = jax.random.split(key, 3)
    x = jax.random.normal(kx, (B, S, D), jnp.float32)
    # padding-style mask: 1.0 = attend, 0.0 = masked (last key of batch 1 masked)
    mask = jnp.ones((B, S, S), jnp.float32)
    mask = mask.at[1, :, S - 1].set(0.0)
    params = init_params(kp)
    packed = pack_params(params)   # one-time prep, outside the per-call path

    out = jax.block_until_ready(encoder_block(x, mask, packed))
    ref = encoder_block_ref(x, mask, params)
    assert out.shape == (B, S, D)
    err = float(jnp.max(jnp.abs(out - ref)))
    assert jnp.allclose(out, ref, atol=2e-4, rtol=2e-4), f"max abs err {err}"
    print("KERNEL_OK")
</pallas_src>

<mosaic_0001>
module attributes {stable_mosaic.version = 11 : i64} {
  func.func @encoder_block_kernel(%arg0: memref<4xf32, #tpu.memory_space<smem>>, %arg1: memref<16x32xf32, #tpu.memory_space<vmem>>, %arg2: memref<2x8x8xf32, #tpu.memory_space<vmem>>, %arg3: memref<32x96xf32, #tpu.memory_space<vmem>>, %arg4: memref<32x32xf32, #tpu.memory_space<vmem>>, %arg5: memref<32x64xf32, #tpu.memory_space<vmem>>, %arg6: memref<64x32xf32, #tpu.memory_space<vmem>>, %arg7: memref<4x96xf32, #tpu.memory_space<vmem>>, %arg8: memref<16x32xf32, #tpu.memory_space<vmem>>, %arg9: memref<16x32xf32, #tpu.memory_space<vmem>>) attributes {dimension_semantics = [], scalar_prefetch = 0 : i64, scratch_operands = 1 : i64, tpu.core_type = #tpu.core_type<tc>} {
    %c0 = arith.constant 0 : index
    %c0_0 = arith.constant 0 : index
    %0 = vector.load %arg1[%c0, %c0_0] : memref<16x32xf32, #tpu.memory_space<vmem>>, vector<16x32xf32>
    %c0_1 = arith.constant 0 : index
    %1 = memref.load %arg0[%c0_1] : memref<4xf32, #tpu.memory_space<smem>>
    %c1 = arith.constant 1 : index
    %2 = memref.load %arg0[%c1] : memref<4xf32, #tpu.memory_space<smem>>
    %c2 = arith.constant 2 : index
    %3 = memref.load %arg0[%c2] : memref<4xf32, #tpu.memory_space<smem>>
    %c3 = arith.constant 3 : index
    %4 = memref.load %arg0[%c3] : memref<4xf32, #tpu.memory_space<smem>>
    %cst = arith.constant dense<0.000000e+00> : vector<16xf32>
    %5 = vector.multi_reduction <add>, %0, %cst [1] : vector<16x32xf32> to vector<16xf32>
    %6 = vector.shape_cast %5 : vector<16xf32> to vector<16x1xf32>
    %cst_2 = arith.constant 3.200000e+01 : f32
    %7 = vector.broadcast %cst_2 : f32 to vector<16x1xf32>
    %8 = arith.divf %6, %7 : vector<16x1xf32>
    %9 = vector.broadcast %8 : vector<16x1xf32> to vector<16x32xf32>
    %10 = arith.subf %0, %9 : vector<16x32xf32>
    %11 = arith.mulf %10, %10 : vector<16x32xf32>
    %cst_3 = arith.constant dense<0.000000e+00> : vector<16xf32>
    %12 = vector.multi_reduction <add>, %11, %cst_3 [1] : vector<16x32xf32> to vector<16xf32>
    %13 = vector.shape_cast %12 : vector<16xf32> to vector<16x1xf32>
    %cst_4 = arith.constant 0.0322580636 : f32
    %14 = vector.broadcast %cst_4 : f32 to vector<16x1xf32>
    %15 = arith.mulf %13, %14 : vector<16x1xf32>
    %16 = vector.broadcast %1 : f32 to vector<16x32xf32>
    %17 = arith.mulf %16, %10 : vector<16x32xf32>
    %18 = math.sqrt %15 : vector<16x1xf32>
    %cst_5 = arith.constant 9.99999997E-7 : f32
    %19 = vector.broadcast %cst_5 : f32 to vector<16x1xf32>
    %20 = arith.addf %18, %19 : vector<16x1xf32>
    %21 = vector.broadcast %20 : vector<16x1xf32> to vector<16x32xf32>
    %22 = arith.divf %17, %21 : vector<16x32xf32>
    %23 = vector.broadcast %2 : f32 to vector<16x32xf32>
    %24 = arith.addf %22, %23 : vector<16x32xf32>
    %c0_6 = arith.constant 0 : index
    %c0_7 = arith.constant 0 : index
    %25 = vector.load %arg3[%c0_6, %c0_7] : memref<32x96xf32, #tpu.memory_space<vmem>>, vector<32x96xf32>
    %cst_8 = arith.constant dense<0.000000e+00> : vector<16x96xf32>
    %26 = tpu.matmul %24, %25, %cst_8 {dimension_numbers = #tpu.dot_dimension_numbers<[1], [0], [0], [1], [0, 0, 1, 1], [], []>} : vector<16x32xf32>, vector<32x96xf32>, vector<16x96xf32> -> vector<16x96xf32>
    %c0_9 = arith.constant 0 : index
    %c0_10 = arith.constant 0 : index
    %27 = vector.load %arg7[%c0_9, %c0_10] : memref<4x96xf32, #tpu.memory_space<vmem>>, vector<1x96xf32>
    %28 = vector.shape_cast %27 : vector<1x96xf32> to vector<96xf32>
    %29 = vector.shape_cast %28 : vector<96xf32> to vector<1x96xf32>
    %30 = vector.broadcast %29 : vector<1x96xf32> to vector<16x96xf32>
    %31 = arith.addf %26, %30 : vector<16x96xf32>
    %c0_11 = arith.constant 0 : index
    %c0_12 = arith.constant 0 : index
    %c0_13 = arith.constant 0 : index
    %32 = vector.load %arg2[%c0_11, %c0_12, %c0_13] : memref<2x8x8xf32, #tpu.memory_space<vmem>>, vector<1x8x8xf32>
    %33 = vector.shape_cast %32 : vector<1x8x8xf32> to vector<8x8xf32>
    %cst_14 = arith.constant 1.000000e+00 : f32
    %34 = vector.broadcast %cst_14 : f32 to vector<8x8xf32>
    %35 = arith.subf %33, %34 : vector<8x8xf32>
    %cst_15 = arith.constant 1.000000e+09 : f32
    %36 = vector.broadcast %cst_15 : f32 to vector<8x8xf32>
    %37 = arith.mulf %35, %36 : vector<8x8xf32>
    %cst_16 = arith.constant -1.000000e+09 : f32
    %38 = vector.broadcast %cst_16 : f32 to vector<8x8xf32>
    %39 = tpu.concatenate %37, %38 in 1 : vector<8x8xf32>, vector<8x8xf32> -> vector<8x16xf32>
    %cst_17 = arith.constant -1.000000e+09 : f32
    %40 = vector.broadcast %cst_17 : f32 to vector<8x8xf32>
    %c1_18 = arith.constant 1 : index
    %c0_19 = arith.constant 0 : index
    %c0_20 = arith.constant 0 : index
    %41 = vector.load %arg2[%c1_18, %c0_19, %c0_20] : memref<2x8x8xf32, #tpu.memory_space<vmem>>, vector<1x8x8xf32>
    %42 = vector.shape_cast %41 : vector<1x8x8xf32> to vector<8x8xf32>
    %cst_21 = arith.constant 1.000000e+00 : f32
    %43 = vector.broadcast %cst_21 : f32 to vector<8x8xf32>
    %44 = arith.subf %42, %43 : vector<8x8xf32>
    %cst_22 = arith.constant 1.000000e+09 : f32
    %45 = vector.broadcast %cst_22 : f32 to vector<8x8xf32>
    %46 = arith.mulf %44, %45 : vector<8x8xf32>
    %47 = tpu.concatenate %40, %46 in 1 : vector<8x8xf32>, vector<8x8xf32> -> vector<8x16xf32>
    %48 = tpu.concatenate %39, %47 in 0 : vector<8x16xf32>, vector<8x16xf32> -> vector<16x16xf32>
    %49 = vector.extract_strided_slice %31 {offsets = [0, 0], sizes = [16, 8], strides = [1, 1]} : vector<16x96xf32> to vector<16x8xf32>
    %50 = vector.extract_strided_slice %31 {offsets = [0, 32], sizes = [16, 8], strides = [1, 1]} : vector<16x96xf32> to vector<16x8xf32>
    %51 = vector.extract_strided_slice %31 {offsets = [0, 64], sizes = [16, 8], strides = [1, 1]} : vector<16x96xf32> to vector<16x8xf32>
    "tpu.trace_start"() <{level = 10 : i32, message = "qd,kd->qk"}> : () -> ()
    %cst_23 = arith.constant dense<0.000000e+00> : vector<16x16xf32>
    %52 = tpu.matmul %49, %50, %cst_23 {dimension_numbers = #tpu.dot_dimension_numbers<[1], [1], [0], [0], [0, 0, 1, 0], [], []>} : vector<16x8xf32>, vector<16x8xf32>, vector<16x16xf32> -> vector<16x16xf32>
    "tpu.trace_stop"() : () -> ()
    %cst_24 = arith.constant 0.353553385 : f32
    %53 = vector.broadcast %cst_24 : f32 to vector<16x16xf32>
    %54 = arith.mulf %52, %53 : vector<16x16xf32>
    %55 = arith.addf %54, %48 : vector<16x16xf32>
    %cst_25 = arith.constant dense<0xFF800000> : vector<16xf32>
    %56 = vector.multi_reduction <maximumf>, %55, %cst_25 [1] : vector<16x16xf32> to vector<16xf32>
    %57 = vector.shape_cast %56 : vector<16xf32> to vector<16x1xf32>
    %58 = vector.broadcast %57 : vector<16x1xf32> to vector<16x16xf32>
    %59 = arith.subf %55, %58 : vector<16x16xf32>
    %60 = math.exp %59 : vector<16x16xf32>
    %cst_26 = arith.constant dense<0.000000e+00> : vector<16xf32>
    %61 = vector.multi_reduction <add>, %60, %cst_26 [1] : vector<16x16xf32> to vector<16xf32>
    %62 = vector.shape_cast %61 : vector<16xf32> to vector<16x1xf32>
    %63 = vector.broadcast %62 : vector<16x1xf32> to vector<16x16xf32>
    %64 = arith.divf %60, %63 : vector<16x16xf32>
    %cst_27 = arith.constant dense<0.000000e+00> : vector<16x8xf32>
    %65 = tpu.matmul %64, %51, %cst_27 {dimension_numbers = #tpu.dot_dimension_numbers<[1], [0], [0], [1], [0, 0, 1, 1], [], []>} : vector<16x16xf32>, vector<16x8xf32>, vector<16x8xf32> -> vector<16x8xf32>
    %c0_28 = arith.constant 0 : index
    %c0_29 = arith.constant 0 : index
    %66 = vector.load %arg9[%c0_28, %c0_29] : memref<16x32xf32, #tpu.memory_space<vmem>>, vector<16x8xf32>
    tpu.vector_store %arg9[%c0_28, %c0_29], %65 {strides = array<i32>} : memref<16x32xf32, #tpu.memory_space<vmem>>, vector<16x8xf32>,
    %67 = vector.extract_strided_slice %31 {offsets = [0, 8], sizes = [16, 8], strides = [1, 1]} : vector<16x96xf32> to vector<16x8xf32>
    %68 = vector.extract_strided_slice %31 {offsets = [0, 40], sizes = [16, 8], strides = [1, 1]} : vector<16x96xf32> to vector<16x8xf32>
    %69 = vector.extract_strided_slice %31 {offsets = [0, 72], sizes = [16, 8], strides = [1, 1]} : vector<16x96xf32> to vector<16x8xf32>
    "tpu.trace_start"() <{level = 10 : i32, message = "qd,kd->qk"}> : () -> ()
    %cst_30 = arith.constant dense<0.000000e+00> : vector<16x16xf32>
    %70 = tpu.matmul %67, %68, %cst_30 {dimension_numbers = #tpu.dot_dimension_numbers<[1], [1], [0], [0], [0, 0, 1, 0], [], []>} : vector<16x8xf32>, vector<16x8xf32>, vector<16x16xf32> -> vector<16x16xf32>
    "tpu.trace_stop"() : () -> ()
    %cst_31 = arith.constant 0.353553385 : f32
    %71 = vector.broadcast %cst_31 : f32 to vector<16x16xf32>
    %72 = arith.mulf %70, %71 : vector<16x16xf32>
    %73 = arith.addf %72, %48 : vector<16x16xf32>
    %cst_32 = arith.constant dense<0xFF800000> : vector<16xf32>
    %74 = vector.multi_reduction <maximumf>, %73, %cst_32 [1] : vector<16x16xf32> to vector<16xf32>
    %75 = vector.shape_cast %74 : vector<16xf32> to vector<16x1xf32>
    %76 = vector.broadcast %75 : vector<16x1xf32> to vector<16x16xf32>
    %77 = arith.subf %73, %76 : vector<16x16xf32>
    %78 = math.exp %77 : vector<16x16xf32>
    %cst_33 = arith.constant dense<0.000000e+00> : vector<16xf32>
    %79 = vector.multi_reduction <add>, %78, %cst_33 [1] : vector<16x16xf32> to vector<16xf32>
    %80 = vector.shape_cast %79 : vector<16xf32> to vector<16x1xf32>
    %81 = vector.broadcast %80 : vector<16x1xf32> to vector<16x16xf32>
    %82 = arith.divf %78, %81 : vector<16x16xf32>
    %cst_34 = arith.constant dense<0.000000e+00> : vector<16x8xf32>
    %83 = tpu.matmul %82, %69, %cst_34 {dimension_numbers = #tpu.dot_dimension_numbers<[1], [0], [0], [1], [0, 0, 1, 1], [], []>} : vector<16x16xf32>, vector<16x8xf32>, vector<16x8xf32> -> vector<16x8xf32>
    %c0_35 = arith.constant 0 : index
    %c8 = arith.constant 8 : index
    %84 = vector.load %arg9[%c0_35, %c8] : memref<16x32xf32, #tpu.memory_space<vmem>>, vector<16x8xf32>
    tpu.vector_store %arg9[%c0_35, %c8], %83 {strides = array<i32>} : memref<16x32xf32, #tpu.memory_space<vmem>>, vector<16x8xf32>,
    %85 = vector.extract_strided_slice %31 {offsets = [0, 16], sizes = [16, 8], strides = [1, 1]} : vector<16x96xf32> to vector<16x8xf32>
    %86 = vector.extract_strided_slice %31 {offsets = [0, 48], sizes = [16, 8], strides = [1, 1]} : vector<16x96xf32> to vector<16x8xf32>
    %87 = vector.extract_strided_slice %31 {offsets = [0, 80], sizes = [16, 8], strides = [1, 1]} : vector<16x96xf32> to vector<16x8xf32>
    "tpu.trace_start"() <{level = 10 : i32, message = "qd,kd->qk"}> : () -> ()
    %cst_36 = arith.constant dense<0.000000e+00> : vector<16x16xf32>
    %88 = tpu.matmul %85, %86, %cst_36 {dimension_numbers = #tpu.dot_dimension_numbers<[1], [1], [0], [0], [0, 0, 1, 0], [], []>} : vector<16x8xf32>, vector<16x8xf32>, vector<16x16xf32> -> vector<16x16xf32>
    "tpu.trace_stop"() : () -> ()
    %cst_37 = arith.constant 0.353553385 : f32
    %89 = vector.broadcast %cst_37 : f32 to vector<16x16xf32>
    %90 = arith.mulf %88, %89 : vector<16x16xf32>
    %91 = arith.addf %90, %48 : vector<16x16xf32>
    %cst_38 = arith.constant dense<0xFF800000> : vector<16xf32>
    %92 = vector.multi_reduction <maximumf>, %91, %cst_38 [1] : vector<16x16xf32> to vector<16xf32>
    %93 = vector.shape_cast %92 : vector<16xf32> to vector<16x1xf32>
    %94 = vector.broadcast %93 : vector<16x1xf32> to vector<16x16xf32>
    %95 = arith.subf %91, %94 : vector<16x16xf32>
    %96 = math.exp %95 : vector<16x16xf32>
    %cst_39 = arith.constant dense<0.000000e+00> : vector<16xf32>
    %97 = vector.multi_reduction <add>, %96, %cst_39 [1] : vector<16x16xf32> to vector<16xf32>
    %98 = vector.shape_cast %97 : vector<16xf32> to vector<16x1xf32>
    %99 = vector.broadcast %98 : vector<16x1xf32> to vector<16x16xf32>
    %100 = arith.divf %96, %99 : vector<16x16xf32>
    %cst_40 = arith.constant dense<0.000000e+00> : vector<16x8xf32>
    %101 = tpu.matmul %100, %87, %cst_40 {dimension_numbers = #tpu.dot_dimension_numbers<[1], [0], [0], [1], [0, 0, 1, 1], [], []>} : vector<16x16xf32>, vector<16x8xf32>, vector<16x8xf32> -> vector<16x8xf32>
    %c0_41 = arith.constant 0 : index
    %c16 = arith.constant 16 : index
    %102 = vector.load %arg9[%c0_41, %c16] : memref<16x32xf32, #tpu.memory_space<vmem>>, vector<16x8xf32>
    tpu.vector_store %arg9[%c0_41, %c16], %101 {strides = array<i32>} : memref<16x32xf32, #tpu.memory_space<vmem>>, vector<16x8xf32>,
    %103 = vector.extract_strided_slice %31 {offsets = [0, 24], sizes = [16, 8], strides = [1, 1]} : vector<16x96xf32> to vector<16x8xf32>
    %104 = vector.extract_strided_slice %31 {offsets = [0, 56], sizes = [16, 8], strides = [1, 1]} : vector<16x96xf32> to vector<16x8xf32>
    %105 = vector.extract_strided_slice %31 {offsets = [0, 88], sizes = [16, 8], strides = [1, 1]} : vector<16x96xf32> to vector<16x8xf32>
    "tpu.trace_start"() <{level = 10 : i32, message = "qd,kd->qk"}> : () -> ()
    %cst_42 = arith.constant dense<0.000000e+00> : vector<16x16xf32>
    %106 = tpu.matmul %103, %104, %cst_42 {dimension_numbers = #tpu.dot_dimension_numbers<[1], [1], [0], [0], [0, 0, 1, 0], [], []>} : vector<16x8xf32>, vector<16x8xf32>, vector<16x16xf32> -> vector<16x16xf32>
    "tpu.trace_stop"() : () -> ()
    %cst_43 = arith.constant 0.353553385 : f32
    %107 = vector.broadcast %cst_43 : f32 to vector<16x16xf32>
    %108 = arith.mulf %106, %107 : vector<16x16xf32>
    %109 = arith.addf %108, %48 : vector<16x16xf32>
    %cst_44 = arith.constant dense<0xFF800000> : vector<16xf32>
    %110 = vector.multi_reduction <maximumf>, %109, %cst_44 [1] : vector<16x16xf32> to vector<16xf32>
    %111 = vector.shape_cast %110 : vector<16xf32> to vector<16x1xf32>
    %112 = vector.broadcast %111 : vector<16x1xf32> to vector<16x16xf32>
    %113 = arith.subf %109, %112 : vector<16x16xf32>
    %114 = math.exp %113 : vector<16x16xf32>
    %cst_45 = arith.constant dense<0.000000e+00> : vector<16xf32>
    %115 = vector.multi_reduction <add>, %114, %cst_45 [1] : vector<16x16xf32> to vector<16xf32>
    %116 = vector.shape_cast %115 : vector<16xf32> to vector<16x1xf32>
    %117 = vector.broadcast %116 : vector<16x1xf32> to vector<16x16xf32>
    %118 = arith.divf %114, %117 : vector<16x16xf32>
    %cst_46 = arith.constant dense<0.000000e+00> : vector<16x8xf32>
    %119 = tpu.matmul %118, %105, %cst_46 {dimension_numbers = #tpu.dot_dimension_numbers<[1], [0], [0], [1], [0, 0, 1, 1], [], []>} : vector<16x16xf32>, vector<16x8xf32>, vector<16x8xf32> -> vector<16x8xf32>
    %c0_47 = arith.constant 0 : index
    %c24 = arith.constant 24 : index
    %120 = vector.load %arg9[%c0_47, %c24] : memref<16x32xf32, #tpu.memory_space<vmem>>, vector<16x8xf32>
    tpu.vector_store %arg9[%c0_47, %c24], %119 {strides = array<i32>} : memref<16x32xf32, #tpu.memory_space<vmem>>, vector<16x8xf32>,
    %c0_48 = arith.constant 0 : index
    %c0_49 = arith.constant 0 : index
    %121 = vector.load %arg9[%c0_48, %c0_49] : memref<16x32xf32, #tpu.memory_space<vmem>>, vector<16x32xf32>
    %c0_50 = arith.constant 0 : index
    %c0_51 = arith.constant 0 : index
    %122 = vector.load %arg4[%c0_50, %c0_51] : memref<32x32xf32, #tpu.memory_space<vmem>>, vector<32x32xf32>
    %cst_52 = arith.constant dense<0.000000e+00> : vector<16x32xf32>
    %123 = tpu.matmul %121, %122, %cst_52 {dimension_numbers = #tpu.dot_dimension_numbers<[1], [0], [0], [1], [0, 0, 1, 1], [], []>} : vector<16x32xf32>, vector<32x32xf32>, vector<16x32xf32> -> vector<16x32xf32>
    %c1_53 = arith.constant 1 : index
    %c0_54 = arith.constant 0 : index
    %124 = vector.load %arg7[%c1_53, %c0_54] : memref<4x96xf32, #tpu.memory_space<vmem>>, vector<1x32xf32>
    %125 = vector.shape_cast %124 : vector<1x32xf32> to vector<32xf32>
    %126 = vector.shape_cast %125 : vector<32xf32> to vector<1x32xf32>
    %127 = vector.broadcast %126 : vector<1x32xf32> to vector<16x32xf32>
    %128 = arith.addf %123, %127 : vector<16x32xf32>
    %129 = arith.addf %0, %128 : vector<16x32xf32>
    %cst_55 = arith.constant dense<0.000000e+00> : vector<16xf32>
    %130 = vector.multi_reduction <add>, %129, %cst_55 [1] : vector<16x32xf32> to vector<16xf32>
    %131 = vector.shape_cast %130 : vector<16xf32> to vector<16x1xf32>
    %cst_56 = arith.constant 3.200000e+01 : f32
    %132 = vector.broadcast %cst_56 : f32 to vector<16x1xf32>
    %133 = arith.divf %131, %132 : vector<16x1xf32>
    %134 = vector.broadcast %133 : vector<16x1xf32> to vector<16x32xf32>
    %135 = arith.subf %129, %134 : vector<16x32xf32>
    %136 = arith.mulf %135, %135 : vector<16x32xf32>
    %cst_57 = arith.constant dense<0.000000e+00> : vector<16xf32>
    %137 = vector.multi_reduction <add>, %136, %cst_57 [1] : vector<16x32xf32> to vector<16xf32>
    %138 = vector.shape_cast %137 : vector<16xf32> to vector<16x1xf32>
    %cst_58 = arith.constant 0.0322580636 : f32
    %139 = vector.broadcast %cst_58 : f32 to vector<16x1xf32>
    %140 = arith.mulf %138, %139 : vector<16x1xf32>
    %141 = vector.broadcast %3 : f32 to vector<16x32xf32>
    %142 = arith.mulf %141, %135 : vector<16x32xf32>
    %143 = math.sqrt %140 : vector<16x1xf32>
    %cst_59 = arith.constant 9.99999997E-7 : f32
    %144 = vector.broadcast %cst_59 : f32 to vector<16x1xf32>
    %145 = arith.addf %143, %144 : vector<16x1xf32>
    %146 = vector.broadcast %145 : vector<16x1xf32> to vector<16x32xf32>
    %147 = arith.divf %142, %146 : vector<16x32xf32>
    %148 = vector.broadcast %4 : f32 to vector<16x32xf32>
    %149 = arith.addf %147, %148 : vector<16x32xf32>
    %c0_60 = arith.constant 0 : index
    %c0_61 = arith.constant 0 : index
    %150 = vector.load %arg5[%c0_60, %c0_61] : memref<32x64xf32, #tpu.memory_space<vmem>>, vector<32x64xf32>
    %cst_62 = arith.constant dense<0.000000e+00> : vector<16x64xf32>
    %151 = tpu.matmul %149, %150, %cst_62 {dimension_numbers = #tpu.dot_dimension_numbers<[1], [0], [0], [1], [0, 0, 1, 1], [], []>} : vector<16x32xf32>, vector<32x64xf32>, vector<16x64xf32> -> vector<16x64xf32>
    %c2_63 = arith.constant 2 : index
    %c0_64 = arith.constant 0 : index
    %152 = vector.load %arg7[%c2_63, %c0_64] : memref<4x96xf32, #tpu.memory_space<vmem>>, vector<1x64xf32>
    %153 = vector.shape_cast %152 : vector<1x64xf32> to vector<64xf32>
    %154 = vector.shape_cast %153 : vector<64xf32> to vector<1x64xf32>
    %155 = vector.broadcast %154 : vector<1x64xf32> to vector<16x64xf32>
    %156 = arith.addf %151, %155 : vector<16x64xf32>
    %cst_65 = arith.constant 0.000000e+00 : f32
    %157 = vector.broadcast %cst_65 : f32 to vector<16x64xf32>
    %158 = arith.maximumf %156, %157 : vector<16x64xf32>
    %c0_66 = arith.constant 0 : index
    %c0_67 = arith.constant 0 : index
    %159 = vector.load %arg6[%c0_66, %c0_67] : memref<64x32xf32, #tpu.memory_space<vmem>>, vector<64x32xf32>
    %cst_68 = arith.constant dense<0.000000e+00> : vector<16x32xf32>
    %160 = tpu.matmul %158, %159, %cst_68 {dimension_numbers = #tpu.dot_dimension_numbers<[1], [0], [0], [1], [0, 0, 1, 1], [], []>} : vector<16x64xf32>, vector<64x32xf32>, vector<16x32xf32> -> vector<16x32xf32>
    %c3_69 = arith.constant 3 : index
    %c0_70 = arith.constant 0 : index
    %161 = vector.load %arg7[%c3_69, %c0_70] : memref<4x96xf32, #tpu.memory_space<vmem>>, vector<1x32xf32>
    %162 = vector.shape_cast %161 : vector<1x32xf32> to vector<32xf32>
    %163 = vector.shape_cast %162 : vector<32xf32> to vector<1x32xf32>
    %164 = vector.broadcast %163 : vector<1x32xf32> to vector<16x32xf32>
    %165 = arith.addf %160, %164 : vector<16x32xf32>
    %166 = arith.addf %129, %165 : vector<16x32xf32>
    %c0_71 = arith.constant 0 : index
    %c0_72 = arith.constant 0 : index
    %167 = vector.load %arg8[%c0_71, %c0_72] : memref<16x32xf32, #tpu.memory_space<vmem>>, vector<16x32xf32>
    tpu.vector_store %arg8[%c0_71, %c0_72], %166 {strides = array<i32>} : memref<16x32xf32, #tpu.memory_space<vmem>>, vector<16x32xf32>,
    return
  }
}

</mosaic_0001>

<llo_original>
// kernel: tpu_custom_call.1
$region0: #{tpu_custom_call.1}
  #allocation0 [shape = 'u32[]', space=smem, size = 0x4, offset = 0x4, fixed_abs, tag = 'smem constant byte address 0x4 - core index']
  #allocation1 [shape = 'u32[144,128]{1,0:T(1,128)}', space=vmem, size = 0x12000, scoped, tag = 'internal scratch']
  #allocation2 [shape = 'f32[16,32]{1,0:T(8,128)}', space=vmem, size = 0x2000, scoped, tag = 'scratch operand']
  %s0 = inlined_call_operand.hbm [shape: f32[4], index: 0, kind: input, shape index: {}]
  %s1 = inlined_call_operand.hbm [shape: f32[16,32], index: 1, kind: input, shape index: {}]
  %s2 = inlined_call_operand.hbm [shape: f32[2,8,8], index: 2, kind: input, shape index: {}]
  %s3 = inlined_call_operand.vmem [shape: f32[32,96], index: 3, kind: input, shape index: {}]
  %s4 = inlined_call_operand.vmem [shape: f32[32,32], index: 4, kind: input, shape index: {}]
  %s5 = inlined_call_operand.vmem [shape: f32[32,64], index: 5, kind: input, shape index: {}]
  %s6 = inlined_call_operand.vmem [shape: f32[64,32], index: 6, kind: input, shape index: {}]
  %s7 = inlined_call_operand.vmem [shape: f32[4,96], index: 7, kind: input, shape index: {}]
  %s8 = inlined_call_operand.hbm [shape: f32[16,32], index: 8, kind: output, shape index: {}]
  %s9 = sld [smem:[#allocation0]]
  $region54: #{tpu_custom_call.1} parent=0
    _
  %s11 = ssub.s32 1, %s9
  %s12 = scalar_select 0, %s11, %s9
  $region1: #{tpu_custom_call.1} parent=0
    #allocation3 [shape = 'u8[512]{0}', space=smem, size = 0x200, scoped, tag = 'input window, operand 0, single buffered']
    #allocation4 [shape = 's32[1]{0}', space=sflag, size = 0x4, scoped, tag = 'scoped memory for tpu_custom_call.1']
    #allocation5 [shape = 's32[1]{0}', space=sflag, size = 0x4, scoped, tag = 'scoped memory for tpu_custom_call.1']
    #allocation6 [shape = 's32[1]{0}', space=sflag, size = 0x4, scoped, tag = 'scoped memory for tpu_custom_call.1']
    #allocation7 [shape = 'u8[8192]{0}', space=vmem, size = 0x2000, scoped, tag = 'input window, operand 1, single buffered']
    #allocation8 [shape = 'u8[8192]{0}', space=vmem, size = 0x2000, scoped, tag = 'input window, operand 2, single buffered']
    #allocation9 [shape = 's32[1]{0}', space=sflag, size = 0x4, scoped, tag = 'scoped memory for tpu_custom_call.1']
    #allocation10 [shape = 'u8[8192]{0}', space=vmem, size = 0x2000, scoped, tag = 'output window, operand 0, single buffered']
    %13 = vsyncpa [#allocation6], 0
    %14 = vsyncpa [#allocation4], 0
    %15 = vsyncpa [#allocation9], 0
    %16 = vsyncpa [#allocation5], 0
    // Predicated region
    $region2: #{tpu_custom_call.1} parent=1 // pred_check
      _
    $region3: #{tpu_custom_call.1} parent=1 // pred_check_branch
      %18 = sbr.rel (0) target = $region5
    $region4: #{tpu_custom_call.1} parent=1 // pred_region
      %s20 = ssub.s32 16, 16
      %21 = vsyncadd [#allocation6], %s20
      %24 = dma.hbm_to_smem %s0, 16, [#allocation3], [#allocation6]
    $region5: #{tpu_custom_call.1} parent=1 // pred_fallthru
      _
    // Predicated region
    $region6: #{tpu_custom_call.1} parent=1 // pred_check
      _
    $region7: #{tpu_custom_call.1} parent=1 // pred_check_branch
      %26 = sbr.rel (0) target = $region9
    $region8: #{tpu_custom_call.1} parent=1 // pred_region
      %s28 = ssub.s32 256, 256
      %29 = vsyncadd [#allocation4], %s28
      %s30 = sshll.u32 [#allocation7], 4
      %s31 = int_to_ptr.vmem [resolvable:$true] %s30
      %36 = dma.hbm_to_vmem [thread:$0]  %s1, 256, %s31, [#allocation4], 128, 128, 8
    $region9: #{tpu_custom_call.1} parent=1 // pred_fallthru
      _
    // Predicated region
    $region10: #{tpu_custom_call.1} parent=1 // pred_check
      _
    $region11: #{tpu_custom_call.1} parent=1 // pred_check_branch
      %38 = sbr.rel (0) target = $region13
    $region12: #{tpu_custom_call.1} parent=1 // pred_region
      %s40 = ssub.s32 256, 256
      %41 = vsyncadd [#allocation9], %s40
      %s42 = sshll.u32 [#allocation8], 4
      %s43 = int_to_ptr.vmem [resolvable:$true] %s42
      %48 = dma.hbm_to_vmem [thread:$0]  %s2, 256, %s43, [#allocation9], 128, 128, 8
    $region13: #{tpu_custom_call.1} parent=1 // pred_fallthru
      _
    // Predicated region
    $region14: #{tpu_custom_call.1} parent=1 // pred_check
      _
    $region15: #{tpu_custom_call.1} parent=1 // pred_check_branch
      %50 = sbr.rel (0) target = $region17
    $region16: #{tpu_custom_call.1} parent=1 // pred_region
      _
    $region17: #{tpu_custom_call.1} parent=1 // pred_fallthru
      _
    // Predicated region
    $region18: #{tpu_custom_call.1} parent=1 // pred_check
      _
    $region19: #{tpu_custom_call.1} parent=1 // pred_check_branch
      %52 = sbr.rel (0) target = $region21
    $region20: #{tpu_custom_call.1} parent=1 // pred_region
      _
    $region21: #{tpu_custom_call.1} parent=1 // pred_fallthru
      _
    // Predicated region
    $region22: #{tpu_custom_call.1} parent=1 // pred_check
      _
    $region23: #{tpu_custom_call.1} parent=1 // pred_check_branch
      %54 = sbr.rel (0) target = $region25
    $region24: #{tpu_custom_call.1} parent=1 // pred_region
      _
    $region25: #{tpu_custom_call.1} parent=1 // pred_fallthru
      _
    // Predicated region
    $region26: #{tpu_custom_call.1} parent=1 // pred_check
      _
    $region27: #{tpu_custom_call.1} parent=1 // pred_check_branch
      %56 = sbr.rel (0) target = $region29
    $region28: #{tpu_custom_call.1} parent=1 // pred_region
      _
    $region29: #{tpu_custom_call.1} parent=1 // pred_fallthru
      _
    // Predicated region
    $region30: #{tpu_custom_call.1} parent=1 // pred_check
      _
    $region31: #{tpu_custom_call.1} parent=1 // pred_check_branch
      %58 = sbr.rel (0) target = $region33
    $region32: #{tpu_custom_call.1} parent=1 // pred_region
      _
    $region33: #{tpu_custom_call.1} parent=1 // pred_fallthru
      _
    // Predicated region
    $region34: #{tpu_custom_call.1} parent=1 // pred_check
      _
    $region35: #{tpu_custom_call.1} parent=1 // pred_check_branch
      %60 = sbr.rel (0) target = $region37
    $region36: #{tpu_custom_call.1} parent=1 // pred_region
      %61 = dma.done [#allocation6], 16
    $region37: #{tpu_custom_call.1} parent=1 // pred_fallthru
      _
    // Predicated region
    $region38: #{tpu_custom_call.1} parent=1 // pred_check
      _
    $region39: #{tpu_custom_call.1} parent=1 // pred_check_branch
      %63 = sbr.rel (0) target = $region41
    $region40: #{tpu_custom_call.1} parent=1 // pred_region
      %64 = dma.done [#allocation4], 256
    $region41: #{tpu_custom_call.1} parent=1 // pred_fallthru
      _
    // Predicated region
    $region42: #{tpu_custom_call.1} parent=1 // pred_check
      _
    $region43: #{tpu_custom_call.1} parent=1 // pred_check_branch
      %66 = sbr.rel (0) target = $region45
    $region44: #{tpu_custom_call.1} parent=1 // pred_region
      %67 = dma.done [#allocation9], 256
    $region45: #{tpu_custom_call.1} parent=1 // pred_fallthru
      _
    %68 = sfence
    %v69 = vld [vmem:[#allocation7] sm:$0xff]
    %v70 = vld [vmem:[#allocation7 + $0x8] sm:$0xff]
    %s71 = sld [smem:[#allocation3]]
    %s72 = sld [smem:[#allocation3 + $0x1]]
    %s73 = sld [smem:[#allocation3 + $0x2]]
    %s74 = sld [smem:[#allocation3 + $0x3]]
    %vm75 = vcmask 261120
    %v76 = vsel %vm75, %v69, 0.0
    %77 = vadd.xlane.f32.xlu0 %v76
    %v78 = vpop.xlane.xlu0 %77
    %v79 = vsel %vm75, %v70, 0.0
    %80 = vadd.xlane.f32.xlu0 %v79
    %v81 = vpop.xlane.xlu0 %80
    %v82 = vrcp.pop 32.0
    %v83 = vmul.f32 %v78, %v82
    %v84 = vmul.f32 %v81, %v82
    %v85 = vsub.f32 %v69, %v83
    %v86 = vsub.f32 %v70, %v84
    %v87 = vmul.f32 %v85, %v85
    %v88 = vmul.f32 %v86, %v86
    %v89 = vsel %vm75, %v87, 0.0
    %90 = vadd.xlane.f32.xlu0 %v89
    %v91 = vpop.xlane.xlu0 %90
    %v92 = vsel %vm75, %v88, 0.0
    %93 = vadd.xlane.f32.xlu0 %v92
    %v94 = vpop.xlane.xlu0 %93
    %v95 = vmul.f32 %v91, 0.032258064
    %v96 = vmul.f32 %v94, 0.032258064
    %v97 = vstv %s71
    %v98 = vmul.f32 %v97, %v85
    %v99 = vmul.f32 %v97, %v86
    %v100 = vrsqrt.pop %v95
    %v101 = vmul.f32 %v95, %v100
    %vm102 = vcmp.eq.f32.partialorder %v95, inf
    %v103 = vsel %vm102, %v95, %v101
    %vm104 = vcmp.eq.f32.partialorder %v95, 0.0
    %v105 = vand.u32 %v95, 2147483648
    %v106 = vsel %vm104, %v105, %v103
    %v107 = vrsqrt.pop %v96
    %v108 = vmul.f32 %v96, %v107
    %vm109 = vcmp.eq.f32.partialorder %v96, inf
    %v110 = vsel %vm109, %v96, %v108
    %vm111 = vcmp.eq.f32.partialorder %v96, 0.0
    %v112 = vand.u32 %v96, 2147483648
    %v113 = vsel %vm111, %v112, %v110
    %v114 = vadd.f32 %v106, 1e-06
    %v115 = vadd.f32 %v113, 1e-06
    %v116 = vrcp.pop %v114
    %v117 = vmul.f32 %v98, %v116
    %v118 = vrcp.pop %v115
    %v119 = vmul.f32 %v99, %v118
    %v120 = vstv %s72
    %v121 = vadd.f32 %v117, %v120
    %v122 = vadd.f32 %v119, %v120
    %v123 = vld [vmem:[%s3] sm:$0xff]
    %v124 = vld [vmem:[%s3 + $0x8] sm:$0xff]
    %v125 = vld [vmem:[%s3 + $0x10] sm:$0xff]
    %v126 = vld [vmem:[%s3 + $0x18] sm:$0xff]
    %v127 = vld [vmem:[%s7] sm:$0x1]
    %v128 = vlaneseq
    %v129 = vshrl.u32 %v128, 7
    %v130 = vsub.s32 0, %v129
    %v131 = vrot.slane %v127, %v130
    %v133 = vsel %vm75, %v121, 0
    %v136 = vsel %vm75, %v122, 0
    %138 = vmatprep.subr.mxu0 0.0
    %139 = vmatpush1.msra.mxu0 0.0
    %140 = vmatprep.subr.mxu0 0.0
    %141 = vmatpush1.msra.mxu0 0.0
    %142 = vmatprep.subr.mxu0 0.0
    %143 = vmatpush1.msra.mxu0 0.0
    %144 = vmatprep.subr.mxu0 0.0
    %145 = vmatpush1.msra.mxu0 0.0
    %146 = vmatprep.subr.mxu0 0.0
    %147 = vmatpush1.msra.mxu0 0.0
    %148 = vmatprep.subr.mxu0 0.0
    %149 = vmatpush1.msra.mxu0 0.0
    %150 = vmatprep.subr.mxu0 0.0
    %151 = vmatpush1.msra.mxu0 0.0
    %152 = vmatprep.subr.mxu0 0.0
    %153 = vmatpush1.msra.mxu0 0.0
    %154 = vmatprep.subr.mxu0 0.0
    %155 = vmatpush1.msra.mxu0 0.0
    %156 = vmatprep.subr.mxu0 0.0
    %157 = vmatpush1.msra.mxu0 0.0
    %158 = vmatprep.subr.mxu0 0.0
    %159 = vmatpush1.msra.mxu0 0.0
    %160 = vmatprep.subr.mxu0 0.0
    %161 = vmatpush1.msra.mxu0 0.0
    %162 = vmatprep.subr.mxu0 0.0
    %163 = vmatpush1.msra.mxu0 %v126
    %164 = vmatprep.subr.mxu0 0.0
    %165 = vmatpush1.msra.mxu0 %v125
    %166 = vmatprep.subr.mxu0 0.0
    %167 = vmatpush1.msra.mxu0 %v124
    %168 = vmatprep.subr.mxu0 0.0
    %169 = vmatpush1.msra.mxu0 %v123
    %170 = vmatprep.subr.mxu0 0.0
    %171 = vmatpush2.msra.mxu0 0.0
    %172 = vmatprep.subr.mxu0 0.0
    %173 = vmatpush2.msra.mxu0 0.0
    %174 = vmatprep.subr.mxu0 0.0
    %175 = vmatpush2.msra.mxu0 0.0
    %176 = vmatprep.subr.mxu0 0.0
    %177 = vmatpush2.msra.mxu0 0.0
    %178 = vmatprep.subr.mxu0 0.0
    %179 = vmatpush2.msra.mxu0 0.0
    %180 = vmatprep.subr.mxu0 0.0
    %181 = vmatpush2.msra.mxu0 0.0
    %182 = vmatprep.subr.mxu0 0.0
    %183 = vmatpush2.msra.mxu0 0.0
    %184 = vmatprep.subr.mxu0 0.0
    %185 = vmatpush2.msra.mxu0 0.0
    %186 = vmatprep.subr.mxu0 0.0
    %187 = vmatpush2.msra.mxu0 0.0
    %188 = vmatprep.subr.mxu0 0.0
    %189 = vmatpush2.msra.mxu0 0.0
    %190 = vmatprep.subr.mxu0 0.0
    %191 = vmatpush2.msra.mxu0 0.0
    %192 = vmatprep.subr.mxu0 0.0
    %193 = vmatpush2.msra.mxu0 0.0
    %194 = vmatprep.subr.mxu0 0.0
    %195 = vmatpush2.msra.mxu0 0.0
    %196 = vmatprep.subr.mxu0 0.0
    %197 = vmatpush2.msra.mxu0 0.0
    %198 = vmatprep.subr.mxu0 0.0
    %199 = vmatpush2.msra.mxu0 0.0
    %200 = vmatprep.subr.mxu0 0.0
    %201 = vmatpush2.msra.mxu0 0.0
    %202 = vmatprep.mubr.f32.mxu0 0.0
    %203 = vmatmul.mubr.f32.gmra.mxu0 %v133
    %v204 = vpop.f32.mrf.mxu0
    %v205 = vadd.f32 %v131, %v204
    %v206 = vpop.f32.mrf.mxu0
    %207 = vmatprep.mubr.f32.mxu0 0.0
    %208 = vmatmul.mubr.f32.gmra.mxu0 %v136
    %v209 = vpop.f32.mrf.mxu0
    %v210 = vadd.f32 %v131, %v209
    %v211 = vpop.f32.mrf.mxu0
    %212 = vdwg.mxu0
    %v213 = vld [vmem:[#allocation8] sm:$0xff]
    %v214 = vsub.f32 %v213, 1.0
    %v215 = vmul.f32 %v214, 1e+09
    %vm216 = vcmask 64512
    %v217 = vsel %vm216, %v215, -1e+09
    %s218 = scalar_lea.vmem [#allocation8], 8
    %v219 = vld [vmem:[%s218] sm:$0xff]
    %v220 = vsub.f32 %v219, 1.0
    %v221 = vmul.f32 %v220, 1e+09
    %223 = vrot.lane.b32.xlu0 %v221, 8
    %v224 = vpop.permute.xlu0 %223
    %v226 = vsel %vm216, -1e+09, %v224
    %229 = vrot.lane.b32.xlu0 %v205, 96
    %v230 = vpop.permute.xlu0 %229
    %231 = vrot.lane.b32.xlu0 %v210, 96
    %v232 = vpop.permute.xlu0 %231
    %v233 = vsel %vm216, %v205, 0
    %v235 = vsel %vm216, %v210, 0
    %v237 = vsel %vm216, %v230, 0
    %v239 = vsel %vm216, %v232, 0
    %241 = vmatprep.subr.mxu0 0.0
    %242 = vmatpush1.xpose.msra.mxu0 0.0
    %243 = vmatprep.subr.mxu0 0.0
    %244 = vmatpush1.xpose.msra.mxu0 0.0
    %245 = vmatprep.subr.mxu0 0.0
    %246 = vmatpush1.xpose.msra.mxu0 0.0
    %247 = vmatprep.subr.mxu0 0.0
    %248 = vmatpush1.xpose.msra.mxu0 0.0
    %249 = vmatprep.subr.mxu0 0.0
    %250 = vmatpush1.xpose.msra.mxu0 0.0
    %251 = vmatprep.subr.mxu0 0.0
    %252 = vmatpush1.xpose.msra.mxu0 0.0
    %253 = vmatprep.subr.mxu0 0.0
    %254 = vmatpush1.xpose.msra.mxu0 0.0
    %255 = vmatprep.subr.mxu0 0.0
    %256 = vmatpush1.xpose.msra.mxu0 0.0
    %257 = vmatprep.subr.mxu0 0.0
    %258 = vmatpush1.xpose.msra.mxu0 0.0
    %259 = vmatprep.subr.mxu0 0.0
    %260 = vmatpush1.xpose.msra.mxu0 0.0
    %261 = vmatprep.subr.mxu0 0.0
    %262 = vmatpush1.xpose.msra.mxu0 0.0
    %263 = vmatprep.subr.mxu0 0.0
    %264 = vmatpush1.xpose.msra.mxu0 0.0
    %265 = vmatprep.subr.mxu0 0.0
    %266 = vmatpush1.xpose.msra.mxu0 0.0
    %267 = vmatprep.subr.mxu0 0.0
    %268 = vmatpush1.xpose.msra.mxu0 0.0
    %269 = vmatprep.subr.mxu0 0.0
    %270 = vmatpush1.xpose.msra.mxu0 %v239
    %271 = vmatprep.subr.mxu0 0.0
    %272 = vmatpush1.xpose.msra.mxu0 %v237
    %273 = vmatprep.subr.mxu0 0.0
    %274 = vmatpush2.xpose.msra.mxu0 0.0
    %275 = vmatprep.subr.mxu0 0.0
    %276 = vmatpush2.xpose.msra.mxu0 0.0
    %277 = vmatprep.subr.mxu0 0.0
    %278 = vmatpush2.xpose.msra.mxu0 0.0
    %279 = vmatprep.subr.mxu0 0.0
    %280 = vmatpush2.xpose.msra.mxu0 0.0
    %281 = vmatprep.subr.mxu0 0.0
    %282 = vmatpush2.xpose.msra.mxu0 0.0
    %283 = vmatprep.subr.mxu0 0.0
    %284 = vmatpush2.xpose.msra.mxu0 0.0
    %285 = vmatprep.subr.mxu0 0.0
    %286 = vmatpush2.xpose.msra.mxu0 0.0
    %287 = vmatprep.subr.mxu0 0.0
    %288 = vmatpush2.xpose.msra.mxu0 0.0
    %289 = vmatprep.subr.mxu0 0.0
    %290 = vmatpush2.xpose.msra.mxu0 0.0
    %291 = vmatprep.subr.mxu0 0.0
    %292 = vmatpush2.xpose.msra.mxu0 0.0
    %293 = vmatprep.subr.mxu0 0.0
    %294 = vmatpush2.xpose.msra.mxu0 0.0
    %295 = vmatprep.subr.mxu0 0.0
    %296 = vmatpush2.xpose.msra.mxu0 0.0
    %297 = vmatprep.subr.mxu0 0.0
    %298 = vmatpush2.xpose.msra.mxu0 0.0
    %299 = vmatprep.subr.mxu0 0.0
    %300 = vmatpush2.xpose.msra.mxu0 0.0
    %301 = vmatprep.subr.mxu0 0.0
    %302 = vmatpush2.xpose.msra.mxu0 0.0
    %303 = vmatprep.subr.mxu0 0.0
    %304 = vmatpush2.xpose.msra.mxu0 0.0
    %305 = vmatprep.mubr.f32.mxu0 0.0
    %306 = vmatmul.mubr.f32.gmra.mxu0 %v233
    %v307 = vpop.f32.mrf.mxu0
    %v308 = vadd.f32 0.0, %v307
    %v309 = vpop.f32.mrf.mxu0
    %310 = vmatprep.mubr.f32.mxu0 0.0
    %311 = vmatmul.mubr.f32.gmra.mxu0 %v235
    %v312 = vpop.f32.mrf.mxu0
    %v313 = vadd.f32 0.0, %v312
    %v314 = vpop.f32.mrf.mxu0
    %315 = vdwg.mxu0
    %v316 = vmul.f32 %v308, 0.35355338
    %v317 = vmul.f32 %v313, 0.35355338
    %v318 = vadd.f32 %v316, %v217
    %v319 = vadd.f32 %v317, %v226
    %vm320 = vcmask 130048
    %v321 = vsel %vm320, %v318, -inf
    %322 = vmax.xlane.f32.xlu0 %v321
    %v323 = vpop.xlane.xlu0 %322
    %v324 = vsel %vm320, %v319, -inf
    %325 = vmax.xlane.f32.xlu0 %v324
    %v326 = vpop.xlane.xlu0 %325
    %v327 = vsub.f32 %v318, %v323
    %v328 = vsub.f32 %v319, %v326
    %v329 = vmul.f32 %v327, 1.442695
    %v330 = vpow.pop %v329
    %v331 = vmul.f32 %v328, 1.442695
    %v332 = vpow.pop %v331
    %v333 = vsel %vm320, %v330, 0.0
    %334 = vadd.xlane.f32.xlu0 %v333
    %v335 = vpop.xlane.xlu0 %334
    %v336 = vsel %vm320, %v332, 0.0
    %337 = vadd.xlane.f32.xlu0 %v336
    %v338 = vpop.xlane.xlu0 %337
    %v339 = vrcp.pop %v335
    %v340 = vmul.f32 %v330, %v339
    %v341 = vrcp.pop %v338
    %v342 = vmul.f32 %v332, %v341
    %343 = vrot.lane.b32.xlu0 %v205, 64
    %v344 = vpop.permute.xlu0 %343
    %345 = vrot.lane.b32.xlu0 %v210, 64
    %v346 = vpop.permute.xlu0 %345
    %v350 = vsel %vm320, %v340, 0
    %v353 = vsel %vm320, %v342, 0
    %355 = vmatprep.subr.mxu0 0.0
    %356 = vmatpush1.msra.mxu0 0.0
    %357 = vmatprep.subr.mxu0 0.0
    %358 = vmatpush1.msra.mxu0 0.0
    %359 = vmatprep.subr.mxu0 0.0
    %360 = vmatpush1.msra.mxu0 0.0
    %361 = vmatprep.subr.mxu0 0.0
    %362 = vmatpush1.msra.mxu0 0.0
    %363 = vmatprep.subr.mxu0 0.0
    %364 = vmatpush1.msra.mxu0 0.0
    %365 = vmatprep.subr.mxu0 0.0
    %366 = vmatpush1.msra.mxu0 0.0
    %367 = vmatprep.subr.mxu0 0.0
    %368 = vmatpush1.msra.mxu0 0.0
    %369 = vmatprep.subr.mxu0 0.0
    %370 = vmatpush1.msra.mxu0 0.0
    %371 = vmatprep.subr.mxu0 0.0
    %372 = vmatpush1.msra.mxu0 0.0
    %373 = vmatprep.subr.mxu0 0.0
    %374 = vmatpush1.msra.mxu0 0.0
    %375 = vmatprep.subr.mxu0 0.0
    %376 = vmatpush1.msra.mxu0 0.0
    %377 = vmatprep.subr.mxu0 0.0
    %378 = vmatpush1.msra.mxu0 0.0
    %379 = vmatprep.subr.mxu0 0.0
    %380 = vmatpush1.msra.mxu0 0.0
    %381 = vmatprep.subr.mxu0 0.0
    %382 = vmatpush1.msra.mxu0 0.0
    %383 = vmatprep.subr.mxu0 0.0
    %384 = vmatpush1.msra.mxu0 %v346
    %385 = vmatprep.subr.mxu0 0.0
    %386 = vmatpush1.msra.mxu0 %v344
    %387 = vmatprep.subr.mxu0 0.0
    %388 = vmatpush2.msra.mxu0 0.0
    %389 = vmatprep.subr.mxu0 0.0
    %390 = vmatpush2.msra.mxu0 0.0
    %391 = vmatprep.subr.mxu0 0.0
    %392 = vmatpush2.msra.mxu0 0.0
    %393 = vmatprep.subr.mxu0 0.0
    %394 = vmatpush2.msra.mxu0 0.0
    %395 = vmatprep.subr.mxu0 0.0
    %396 = vmatpush2.msra.mxu0 0.0
    %397 = vmatprep.subr.mxu0 0.0
    %398 = vmatpush2.msra.mxu0 0.0
    %399 = vmatprep.subr.mxu0 0.0
    %400 = vmatpush2.msra.mxu0 0.0
    %401 = vmatprep.subr.mxu0 0.0
    %402 = vmatpush2.msra.mxu0 0.0
    %403 = vmatprep.subr.mxu0 0.0
    %404 = vmatpush2.msra.mxu0 0.0
    %405 = vmatprep.subr.mxu0 0.0
    %406 = vmatpush2.msra.mxu0 0.0
    %407 = vmatprep.subr.mxu0 0.0
    %408 = vmatpush2.msra.mxu0 0.0
    %409 = vmatprep.subr.mxu0 0.0
    %410 = vmatpush2.msra.mxu0 0.0
    %411 = vmatprep.subr.mxu0 0.0
    %412 = vmatpush2.msra.mxu0 0.0
    %413 = vmatprep.subr.mxu0 0.0
    %414 = vmatpush2.msra.mxu0 0.0
    %415 = vmatprep.subr.mxu0 0.0
    %416 = vmatpush2.msra.mxu0 0.0
    %417 = vmatprep.subr.mxu0 0.0
    %418 = vmatpush2.msra.mxu0 0.0
    %419 = vmatprep.mubr.f32.mxu0 0.0
    %420 = vmatmul.mubr.f32.gmra.mxu0 %v350
    %v421 = vpop.f32.mrf.mxu0
    %v422 = vadd.f32 0.0, %v421
    %v423 = vpop.f32.mrf.mxu0
    %424 = vmatprep.mubr.f32.mxu0 0.0
    %425 = vmatmul.mubr.f32.gmra.mxu0 %v353
    %v426 = vpop.f32.mrf.mxu0
    %v427 = vadd.f32 0.0, %v426
    %v428 = vpop.f32.mrf.mxu0
    %429 = vdwg.mxu0
    %430 = vst.msk [vmem:[#allocation2] sm:$0xff] %vm216, %v422
    %431 = vst.msk [vmem:[#allocation2 + $0x8] sm:$0xff] %vm216, %v427
    %432 = vrot.lane.b32.xlu0 %v205, 120
    %v433 = vpop.permute.xlu0 %432
    %434 = vrot.lane.b32.xlu0 %v210, 120
    %v435 = vpop.permute.xlu0 %434
    %436 = vrot.lane.b32.xlu0 %v205, 88
    %v437 = vpop.permute.xlu0 %436
    %438 = vrot.lane.b32.xlu0 %v210, 88
    %v439 = vpop.permute.xlu0 %438
    %v440 = vsel %vm216, %v433, 0
    %v442 = vsel %vm216, %v435, 0
    %v444 = vsel %vm216, %v437, 0
    %v446 = vsel %vm216, %v439, 0
    %448 = vmatprep.subr.mxu0 0.0
    %449 = vmatpush1.xpose.msra.mxu0 0.0
    %450 = vmatprep.subr.mxu0 0.0
    %451 = vmatpush1.xpose.msra.mxu0 0.0
    %452 = vmatprep.subr.mxu0 0.0
    %453 = vmatpush1.xpose.msra.mxu0 0.0
    %454 = vmatprep.subr.mxu0 0.0
    %455 = vmatpush1.xpose.msra.mxu0 0.0
    %456 = vmatprep.subr.mxu0 0.0
    %457 = vmatpush1.xpose.msra.mxu0 0.0
    %458 = vmatprep.subr.mxu0 0.0
    %459 = vmatpush1.xpose.msra.mxu0 0.0
    %460 = vmatprep.subr.mxu0 0.0
    %461 = vmatpush1.xpose.msra.mxu0 0.0
    %462 = vmatprep.subr.mxu0 0.0
    %463 = vmatpush1.xpose.msra.mxu0 0.0
    %464 = vmatprep.subr.mxu0 0.0
    %465 = vmatpush1.xpose.msra.mxu0 0.0
    %466 = vmatprep.subr.mxu0 0.0
    %467 = vmatpush1.xpose.msra.mxu0 0.0
    %468 = vmatprep.subr.mxu0 0.0
    %469 = vmatpush1.xpose.msra.mxu0 0.0
    %470 = vmatprep.subr.mxu0 0.0
    %471 = vmatpush1.xpose.msra.mxu0 0.0
    %472 = vmatprep.subr.mxu0 0.0
    %473 = vmatpush1.xpose.msra.mxu0 0.0
    %474 = vmatprep.subr.mxu0 0.0
    %475 = vmatpush1.xpose.msra.mxu0 0.0
    %476 = vmatprep.subr.mxu0 0.0
    %477 = vmatpush1.xpose.msra.mxu0 %v446
    %478 = vmatprep.subr.mxu0 0.0
    %479 = vmatpush1.xpose.msra.mxu0 %v444
    %480 = vmatprep.subr.mxu0 0.0
    %481 = vmatpush2.xpose.msra.mxu0 0.0
    %482 = vmatprep.subr.mxu0 0.0
    %483 = vmatpush2.xpose.msra.mxu0 0.0
    %484 = vmatprep.subr.mxu0 0.0
    %485 = vmatpush2.xpose.msra.mxu0 0.0
    %486 = vmatprep.subr.mxu0 0.0
    %487 = vmatpush2.xpose.msra.mxu0 0.0
    %488 = vmatprep.subr.mxu0 0.0
    %489 = vmatpush2.xpose.msra.mxu0 0.0
    %490 = vmatprep.subr.mxu0 0.0
    %491 = vmatpush2.xpose.msra.mxu0 0.0
    %492 = vmatprep.subr.mxu0 0.0
    %493 = vmatpush2.xpose.msra.mxu0 0.0
    %494 = vmatprep.subr.mxu0 0.0
    %495 = vmatpush2.xpose.msra.mxu0 0.0
    %496 = vmatprep.subr.mxu0 0.0
    %497 = vmatpush2.xpose.msra.mxu0 0.0
    %498 = vmatprep.subr.mxu0 0.0
    %499 = vmatpush2.xpose.msra.mxu0 0.0
    %500 = vmatprep.subr.mxu0 0.0
    %501 = vmatpush2.xpose.msra.mxu0 0.0
    %502 = vmatprep.subr.mxu0 0.0
    %503 = vmatpush2.xpose.msra.mxu0 0.0
    %504 = vmatprep.subr.mxu0 0.0
    %505 = vmatpush2.xpose.msra.mxu0 0.0
    %506 = vmatprep.subr.mxu0 0.0
    %507 = vmatpush2.xpose.msra.mxu0 0.0
    %508 = vmatprep.subr.mxu0 0.0
    %509 = vmatpush2.xpose.msra.mxu0 0.0
    %510 = vmatprep.subr.mxu0 0.0
    %511 = vmatpush2.xpose.msra.mxu0 0.0
    %512 = vmatprep.mubr.f32.mxu0 0.0
    %513 = vmatmul.mubr.f32.gmra.mxu0 %v440
    %v514 = vpop.f32.mrf.mxu0
    %v515 = vadd.f32 0.0, %v514
    %v516 = vpop.f32.mrf.mxu0
    %517 = vmatprep.mubr.f32.mxu0 0.0
    %518 = vmatmul.mubr.f32.gmra.mxu0 %v442
    %v519 = vpop.f32.mrf.mxu0
    %v520 = vadd.f32 0.0, %v519
    %v521 = vpop.f32.mrf.mxu0
    %522 = vdwg.mxu0
    %v523 = vmul.f32 %v515, 0.35355338
    %v524 = vmul.f32 %v520, 0.35355338
    %v525 = vadd.f32 %v523, %v217
    %v526 = vadd.f32 %v524, %v226
    %v527 = vsel %vm320, %v525, -inf
    %528 = vmax.xlane.f32.xlu0 %v527
    %v529 = vpop.xlane.xlu0 %528
    %v530 = vsel %vm320, %v526, -inf
    %531 = vmax.xlane.f32.xlu0 %v530
    %v532 = vpop.xlane.xlu0 %531
    %v533 = vsub.f32 %v525, %v529
    %v534 = vsub.f32 %v526, %v532
    %v535 = vmul.f32 %v533, 1.442695
    %v536 = vpow.pop %v535
    %v537 = vmul.f32 %v534, 1.442695
    %v538 = vpow.pop %v537
    %v539 = vsel %vm320, %v536, 0.0
    %540 = vadd.xlane.f32.xlu0 %v539
    %v541 = vpop.xlane.xlu0 %540
    %v542 = vsel %vm320, %v538, 0.0
    %543 = vadd.xlane.f32.xlu0 %v542
    %v544 = vpop.xlane.xlu0 %543
    %v545 = vrcp.pop %v541
    %v546 = vmul.f32 %v536, %v545
    %v547 = vrcp.pop %v544
    %v548 = vmul.f32 %v538, %v547
    %549 = vrot.lane.b32.xlu0 %v205, 56
    %v550 = vpop.permute.xlu0 %549
    %551 = vrot.lane.b32.xlu0 %v210, 56
    %v552 = vpop.permute.xlu0 %551
    %v556 = vsel %vm320, %v546, 0
    %v559 = vsel %vm320, %v548, 0
    %561 = vmatprep.subr.mxu0 0.0
    %562 = vmatpush1.msra.mxu0 0.0
    %563 = vmatprep.subr.mxu0 0.0
    %564 = vmatpush1.msra.mxu0 0.0
    %565 = vmatprep.subr.mxu0 0.0
    %566 = vmatpush1.msra.mxu0 0.0
    %567 = vmatprep.subr.mxu0 0.0
    %568 = vmatpush1.msra.mxu0 0.0
    %569 = vmatprep.subr.mxu0 0.0
    %570 = vmatpush1.msra.mxu0 0.0
    %571 = vmatprep.subr.mxu0 0.0
    %572 = vmatpush1.msra.mxu0 0.0
    %573 = vmatprep.subr.mxu0 0.0
    %574 = vmatpush1.msra.mxu0 0.0
    %575 = vmatprep.subr.mxu0 0.0
    %576 = vmatpush1.msra.mxu0 0.0
    %577 = vmatprep.subr.mxu0 0.0
    %578 = vmatpush1.msra.mxu0 0.0
    %579 = vmatprep.subr.mxu0 0.0
    %580 = vmatpush1.msra.mxu0 0.0
    %581 = vmatprep.subr.mxu0 0.0
    %582 = vmatpush1.msra.mxu0 0.0
    %583 = vmatprep.subr.mxu0 0.0
    %584 = vmatpush1.msra.mxu0 0.0
    %585 = vmatprep.subr.mxu0 0.0
    %586 = vmatpush1.msra.mxu0 0.0
    %587 = vmatprep.subr.mxu0 0.0
    %588 = vmatpush1.msra.mxu0 0.0
    %589 = vmatprep.subr.mxu0 0.0
    %590 = vmatpush1.msra.mxu0 %v552
    %591 = vmatprep.subr.mxu0 0.0
    %592 = vmatpush1.msra.mxu0 %v550
    %593 = vmatprep.subr.mxu0 0.0
    %594 = vmatpush2.msra.mxu0 0.0
    %595 = vmatprep.subr.mxu0 0.0
    %596 = vmatpush2.msra.mxu0 0.0
    %597 = vmatprep.subr.mxu0 0.0
    %598 = vmatpush2.msra.mxu0 0.0
    %599 = vmatprep.subr.mxu0 0.0
    %600 = vmatpush2.msra.mxu0 0.0
    %601 = vmatprep.subr.mxu0 0.0
    %602 = vmatpush2.msra.mxu0 0.0
    %603 = vmatprep.subr.mxu0 0.0
    %604 = vmatpush2.msra.mxu0 0.0
    %605 = vmatprep.subr.mxu0 0.0
    %606 = vmatpush2.msra.mxu0 0.0
    %607 = vmatprep.subr.mxu0 0.0
    %608 = vmatpush2.msra.mxu0 0.0
    %609 = vmatprep.subr.mxu0 0.0
    %610 = vmatpush2.msra.mxu0 0.0
    %611 = vmatprep.subr.mxu0 0.0
    %612 = vmatpush2.msra.mxu0 0.0
    %613 = vmatprep.subr.mxu0 0.0
    %614 = vmatpush2.msra.mxu0 0.0
    %615 = vmatprep.subr.mxu0 0.0
    %616 = vmatpush2.msra.mxu0 0.0
    %617 = vmatprep.subr.mxu0 0.0
    %618 = vmatpush2.msra.mxu0 0.0
    %619 = vmatprep.subr.mxu0 0.0
    %620 = vmatpush2.msra.mxu0 0.0
    %621 = vmatprep.subr.mxu0 0.0
    %622 = vmatpush2.msra.mxu0 0.0
    %623 = vmatprep.subr.mxu0 0.0
    %624 = vmatpush2.msra.mxu0 0.0
    %625 = vmatprep.mubr.f32.mxu0 0.0
    %626 = vmatmul.mubr.f32.gmra.mxu0 %v556
    %v627 = vpop.f32.mrf.mxu0
    %v628 = vadd.f32 0.0, %v627
    %v629 = vpop.f32.mrf.mxu0
    %630 = vmatprep.mubr.f32.mxu0 0.0
    %631 = vmatmul.mubr.f32.gmra.mxu0 %v559
    %v632 = vpop.f32.mrf.mxu0
    %v633 = vadd.f32 0.0, %v632
    %v634 = vpop.f32.mrf.mxu0
    %635 = vdwg.mxu0
    %638 = vrot.lane.b32.xlu0 %v628, 8
    %v639 = vpop.permute.xlu0 %638
    %640 = vrot.lane.b32.xlu0 %v633, 8
    %v641 = vpop.permute.xlu0 %640
    %vm644 = vcmask 130112
    %645 = vst.msk [vmem:[#allocation2] sm:$0xff] %vm644, %v639
    %646 = vst.msk [vmem:[#allocation2 + $0x8] sm:$0xff] %vm644, %v641
    %647 = vrot.lane.b32.xlu0 %v205, 112
    %v648 = vpop.permute.xlu0 %647
    %649 = vrot.lane.b32.xlu0 %v210, 112
    %v650 = vpop.permute.xlu0 %649
    %651 = vrot.lane.b32.xlu0 %v205, 80
    %v652 = vpop.permute.xlu0 %651
    %653 = vrot.lane.b32.xlu0 %v210, 80
    %v654 = vpop.permute.xlu0 %653
    %v655 = vsel %vm216, %v648, 0
    %v657 = vsel %vm216, %v650, 0
    %v659 = vsel %vm216, %v652, 0
    %v661 = vsel %vm216, %v654, 0
    %663 = vmatprep.subr.mxu0 0.0
    %664 = vmatpush1.xpose.msra.mxu0 0.0
    %665 = vmatprep.subr.mxu0 0.0
    %666 = vmatpush1.xpose.msra.mxu0 0.0
    %667 = vmatprep.subr.mxu0 0.0
    %668 = vmatpush1.xpose.msra.mxu0 0.0
    %669 = vmatprep.subr.mxu0 0.0
    %670 = vmatpush1.xpose.msra.mxu0 0.0
    %671 = vmatprep.subr.mxu0 0.0
    %672 = vmatpush1.xpose.msra.mxu0 0.0
    %673 = vmatprep.subr.mxu0 0.0
    %674 = vmatpush1.xpose.msra.mxu0 0.0
    %675 = vmatprep.subr.mxu0 0.0
    %676 = vmatpush1.xpose.msra.mxu0 0.0
    %677 = vmatprep.subr.mxu0 0.0
    %678 = vmatpush1.xpose.msra.mxu0 0.0
    %679 = vmatprep.subr.mxu0 0.0
    %680 = vmatpush1.xpose.msra.mxu0 0.0
    %681 = vmatprep.subr.mxu0 0.0
    %682 = vmatpush1.xpose.msra.mxu0 0.0
    %683 = vmatprep.subr.mxu0 0.0
    %684 = vmatpush1.xpose.msra.mxu0 0.0
    %685 = vmatprep.subr.mxu0 0.0
    %686 = vmatpush1.xpose.msra.mxu0 0.0
    %687 = vmatprep.subr.mxu0 0.0
    %688 = vmatpush1.xpose.msra.mxu0 0.0
    %689 = vmatprep.subr.mxu0 0.0
    %690 = vmatpush1.xpose.msra.mxu0 0.0
    %691 = vmatprep.subr.mxu0 0.0
    %692 = vmatpush1.xpose.msra.mxu0 %v661
    %693 = vmatprep.subr.mxu0 0.0
    %694 = vmatpush1.xpose.msra.mxu0 %v659
    %695 = vmatprep.subr.mxu0 0.0
    %696 = vmatpush2.xpose.msra.mxu0 0.0
    %697 = vmatprep.subr.mxu0 0.0
    %698 = vmatpush2.xpose.msra.mxu0 0.0
    %699 = vmatprep.subr.mxu0 0.0
    %700 = vmatpush2.xpose.msra.mxu0 0.0
    %701 = vmatprep.subr.mxu0 0.0
    %702 = vmatpush2.xpose.msra.mxu0 0.0
    %703 = vmatprep.subr.mxu0 0.0
    %704 = vmatpush2.xpose.msra.mxu0 0.0
    %705 = vmatprep.subr.mxu0 0.0
    %706 = vmatpush2.xpose.msra.mxu0 0.0
    %707 = vmatprep.subr.mxu0 0.0
    %708 = vmatpush2.xpose.msra.mxu0 0.0
    %709 = vmatprep.subr.mxu0 0.0
    %710 = vmatpush2.xpose.msra.mxu0 0.0
    %711 = vmatprep.subr.mxu0 0.0
    %712 = vmatpush2.xpose.msra.mxu0 0.0
    %713 = vmatprep.subr.mxu0 0.0
    %714 = vmatpush2.xpose.msra.mxu0 0.0
    %715 = vmatprep.subr.mxu0 0.0
    %716 = vmatpush2.xpose.msra.mxu0 0.0
    %717 = vmatprep.subr.mxu0 0.0
    %718 = vmatpush2.xpose.msra.mxu0 0.0
    %719 = vmatprep.subr.mxu0 0.0
    %720 = vmatpush2.xpose.msra.mxu0 0.0
    %721 = vmatprep.subr.mxu0 0.0
    %722 = vmatpush2.xpose.msra.mxu0 0.0
    %723 = vmatprep.subr.mxu0 0.0
    %724 = vmatpush2.xpose.msra.mxu0 0.0
    %725 = vmatprep.subr.mxu0 0.0
    %726 = vmatpush2.xpose.msra.mxu0 0.0
    %727 = vmatprep.mubr.f32.mxu0 0.0
    %728 = vmatmul.mubr.f32.gmra.mxu0 %v655
    %v729 = vpop.f32.mrf.mxu0
    %v730 = vadd.f32 0.0, %v729
    %v731 = vpop.f32.mrf.mxu0
    %732 = vmatprep.mubr.f32.mxu0 0.0
    %733 = vmatmul.mubr.f32.gmra.mxu0 %v657
    %v734 = vpop.f32.mrf.mxu0
    %v735 = vadd.f32 0.0, %v734
    %v736 = vpop.f32.mrf.mxu0
    %737 = vdwg.mxu0
    %v738 = vmul.f32 %v730, 0.35355338
    %v739 = vmul.f32 %v735, 0.35355338
    %v740 = vadd.f32 %v738, %v217
    %v741 = vadd.f32 %v739, %v226
    %v742 = vsel %vm320, %v740, -inf
    %743 = vmax.xlane.f32.xlu0 %v742
    %v744 = vpop.xlane.xlu0 %743
    %v745 = vsel %vm320, %v741, -inf
    %746 = vmax.xlane.f32.xlu0 %v745
    %v747 = vpop.xlane.xlu0 %746
    %v748 = vsub.f32 %v740, %v744
    %v749 = vsub.f32 %v741, %v747
    %v750 = vmul.f32 %v748, 1.442695
    %v751 = vpow.pop %v750
    %v752 = vmul.f32 %v749, 1.442695
    %v753 = vpow.pop %v752
    %v754 = vsel %vm320, %v751, 0.0
    %755 = vadd.xlane.f32.xlu0 %v754
    %v756 = vpop.xlane.xlu0 %755
    %v757 = vsel %vm320, %v753, 0.0
    %758 = vadd.xlane.f32.xlu0 %v757
    %v759 = vpop.xlane.xlu0 %758
    %v760 = vrcp.pop %v756
    %v761 = vmul.f32 %v751, %v760
    %v762 = vrcp.pop %v759
    %v763 = vmul.f32 %v753, %v762
    %764 = vrot.lane.b32.xlu0 %v205, 48
    %v765 = vpop.permute.xlu0 %764
    %766 = vrot.lane.b32.xlu0 %v210, 48
    %v767 = vpop.permute.xlu0 %766
    %v771 = vsel %vm320, %v761, 0
    %v774 = vsel %vm320, %v763, 0
    %776 = vmatprep.subr.mxu0 0.0
    %777 = vmatpush1.msra.mxu0 0.0
    %778 = vmatprep.subr.mxu0 0.0
    %779 = vmatpush1.msra.mxu0 0.0
    %780 = vmatprep.subr.mxu0 0.0
    %781 = vmatpush1.msra.mxu0 0.0
    %782 = vmatprep.subr.mxu0 0.0
    %783 = vmatpush1.msra.mxu0 0.0
    %784 = vmatprep.subr.mxu0 0.0
    %785 = vmatpush1.msra.mxu0 0.0
    %786 = vmatprep.subr.mxu0 0.0
    %787 = vmatpush1.msra.mxu0 0.0
    %788 = vmatprep.subr.mxu0 0.0
    %789 = vmatpush1.msra.mxu0 0.0
    %790 = vmatprep.subr.mxu0 0.0
    %791 = vmatpush1.msra.mxu0 0.0
    %792 = vmatprep.subr.mxu0 0.0
    %793 = vmatpush1.msra.mxu0 0.0
    %794 = vmatprep.subr.mxu0 0.0
    %795 = vmatpush1.msra.mxu0 0.0
    %796 = vmatprep.subr.mxu0 0.0
    %797 = vmatpush1.msra.mxu0 0.0
    %798 = vmatprep.subr.mxu0 0.0
    %799 = vmatpush1.msra.mxu0 0.0
    %800 = vmatprep.subr.mxu0 0.0
    %801 = vmatpush1.msra.mxu0 0.0
    %802 = vmatprep.subr.mxu0 0.0
    %803 = vmatpush1.msra.mxu0 0.0
    %804 = vmatprep.subr.mxu0 0.0
    %805 = vmatpush1.msra.mxu0 %v767
    %806 = vmatprep.subr.mxu0 0.0
    %807 = vmatpush1.msra.mxu0 %v765
    %808 = vmatprep.subr.mxu0 0.0
    %809 = vmatpush2.msra.mxu0 0.0
    %810 = vmatprep.subr.mxu0 0.0
    %811 = vmatpush2.msra.mxu0 0.0
    %812 = vmatprep.subr.mxu0 0.0
    %813 = vmatpush2.msra.mxu0 0.0
    %814 = vmatprep.subr.mxu0 0.0
    %815 = vmatpush2.msra.mxu0 0.0
    %816 = vmatprep.subr.mxu0 0.0
    %817 = vmatpush2.msra.mxu0 0.0
    %818 = vmatprep.subr.mxu0 0.0
    %819 = vmatpush2.msra.mxu0 0.0
    %820 = vmatprep.subr.mxu0 0.0
    %821 = vmatpush2.msra.mxu0 0.0
    %822 = vmatprep.subr.mxu0 0.0
    %823 = vmatpush2.msra.mxu0 0.0
    %824 = vmatprep.subr.mxu0 0.0
    %825 = vmatpush2.msra.mxu0 0.0
    %826 = vmatprep.subr.mxu0 0.0
    %827 = vmatpush2.msra.mxu0 0.0
    %828 = vmatprep.subr.mxu0 0.0
    %829 = vmatpush2.msra.mxu0 0.0
    %830 = vmatprep.subr.mxu0 0.0
    %831 = vmatpush2.msra.mxu0 0.0
    %832 = vmatprep.subr.mxu0 0.0
    %833 = vmatpush2.msra.mxu0 0.0
    %834 = vmatprep.subr.mxu0 0.0
    %835 = vmatpush2.msra.mxu0 0.0
    %836 = vmatprep.subr.mxu0 0.0
    %837 = vmatpush2.msra.mxu0 0.0
    %838 = vmatprep.subr.mxu0 0.0
    %839 = vmatpush2.msra.mxu0 0.0
    %840 = vmatprep.mubr.f32.mxu0 0.0
    %841 = vmatmul.mubr.f32.gmra.mxu0 %v771
    %v842 = vpop.f32.mrf.mxu0
    %v843 = vadd.f32 0.0, %v842
    %v844 = vpop.f32.mrf.mxu0
    %845 = vmatprep.mubr.f32.mxu0 0.0
    %846 = vmatmul.mubr.f32.gmra.mxu0 %v774
    %v847 = vpop.f32.mrf.mxu0
    %v848 = vadd.f32 0.0, %v847
    %v849 = vpop.f32.mrf.mxu0
    %850 = vdwg.mxu0
    %853 = vrot.lane.b32.xlu0 %v843, 16
    %v854 = vpop.permute.xlu0 %853
    %855 = vrot.lane.b32.xlu0 %v848, 16
    %v856 = vpop.permute.xlu0 %855
    %vm859 = vcmask 195712
    %860 = vst.msk [vmem:[#allocation2] sm:$0xff] %vm859, %v854
    %861 = vst.msk [vmem:[#allocation2 + $0x8] sm:$0xff] %vm859, %v856
    %862 = vrot.lane.b32.xlu0 %v205, 104
    %v863 = vpop.permute.xlu0 %862
    %864 = vrot.lane.b32.xlu0 %v210, 104
    %v865 = vpop.permute.xlu0 %864
    %866 = vrot.lane.b32.xlu0 %v205, 72
    %v867 = vpop.permute.xlu0 %866
    %868 = vrot.lane.b32.xlu0 %v210, 72
    %v869 = vpop.permute.xlu0 %868
    %v870 = vsel %vm216, %v863, 0
    %v872 = vsel %vm216, %v865, 0
    %v874 = vsel %vm216, %v867, 0
    %v876 = vsel %vm216, %v869, 0
    %878 = vmatprep.subr.mxu0 0.0
    %879 = vmatpush1.xpose.msra.mxu0 0.0
    %880 = vmatprep.subr.mxu0 0.0
    %881 = vmatpush1.xpose.msra.mxu0 0.0
    %882 = vmatprep.subr.mxu0 0.0
    %883 = vmatpush1.xpose.msra.mxu0 0.0
    %884 = vmatprep.subr.mxu0 0.0
    %885 = vmatpush1.xpose.msra.mxu0 0.0
    %886 = vmatprep.subr.mxu0 0.0
    %887 = vmatpush1.xpose.msra.mxu0 0.0
    %888 = vmatprep.subr.mxu0 0.0
    %889 = vmatpush1.xpose.msra.mxu0 0.0
    %890 = vmatprep.subr.mxu0 0.0
    %891 = vmatpush1.xpose.msra.mxu0 0.0
    %892 = vmatprep.subr.mxu0 0.0
    %893 = vmatpush1.xpose.msra.mxu0 0.0
    %894 = vmatprep.subr.mxu0 0.0
    %895 = vmatpush1.xpose.msra.mxu0 0.0
    %896 = vmatprep.subr.mxu0 0.0
    %897 = vmatpush1.xpose.msra.mxu0 0.0
    %898 = vmatprep.subr.mxu0 0.0
    %899 = vmatpush1.xpose.msra.mxu0 0.0
    %900 = vmatprep.subr.mxu0 0.0
    %901 = vmatpush1.xpose.msra.mxu0 0.0
    %902 = vmatprep.subr.mxu0 0.0
    %903 = vmatpush1.xpose.msra.mxu0 0.0
    %904 = vmatprep.subr.mxu0 0.0
    %905 = vmatpush1.xpose.msra.mxu0 0.0
    %906 = vmatprep.subr.mxu0 0.0
    %907 = vmatpush1.xpose.msra.mxu0 %v876
    %908 = vmatprep.subr.mxu0 0.0
    %909 = vmatpush1.xpose.msra.mxu0 %v874
    %910 = vmatprep.subr.mxu0 0.0
    %911 = vmatpush2.xpose.msra.mxu0 0.0
    %912 = vmatprep.subr.mxu0 0.0
    %913 = vmatpush2.xpose.msra.mxu0 0.0
    %914 = vmatprep.subr.mxu0 0.0
    %915 = vmatpush2.xpose.msra.mxu0 0.0
    %916 = vmatprep.subr.mxu0 0.0
    %917 = vmatpush2.xpose.msra.mxu0 0.0
    %918 = vmatprep.subr.mxu0 0.0
    %919 = vmatpush2.xpose.msra.mxu0 0.0
    %920 = vmatprep.subr.mxu0 0.0
    %921 = vmatpush2.xpose.msra.mxu0 0.0
    %922 = vmatprep.subr.mxu0 0.0
    %923 = vmatpush2.xpose.msra.mxu0 0.0
    %924 = vmatprep.subr.mxu0 0.0
    %925 = vmatpush2.xpose.msra.mxu0 0.0
    %926 = vmatprep.subr.mxu0 0.0
    %927 = vmatpush2.xpose.msra.mxu0 0.0
    %928 = vmatprep.subr.mxu0 0.0
    %929 = vmatpush2.xpose.msra.mxu0 0.0
    %930 = vmatprep.subr.mxu0 0.0
    %931 = vmatpush2.xpose.msra.mxu0 0.0
    %932 = vmatprep.subr.mxu0 0.0
    %933 = vmatpush2.xpose.msra.mxu0 0.0
    %934 = vmatprep.subr.mxu0 0.0
    %935 = vmatpush2.xpose.msra.mxu0 0.0
    %936 = vmatprep.subr.mxu0 0.0
    %937 = vmatpush2.xpose.msra.mxu0 0.0
    %938 = vmatprep.subr.mxu0 0.0
    %939 = vmatpush2.xpose.msra.mxu0 0.0
    %940 = vmatprep.subr.mxu0 0.0
    %941 = vmatpush2.xpose.msra.mxu0 0.0
    %942 = vmatprep.mubr.f32.mxu0 0.0
    %943 = vmatmul.mubr.f32.gmra.mxu0 %v870
    %v944 = vpop.f32.mrf.mxu0
    %v945 = vadd.f32 0.0, %v944
    %v946 = vpop.f32.mrf.mxu0
    %947 = vmatprep.mubr.f32.mxu0 0.0
    %948 = vmatmul.mubr.f32.gmra.mxu0 %v872
    %v949 = vpop.f32.mrf.mxu0
    %v950 = vadd.f32 0.0, %v949
    %v951 = vpop.f32.mrf.mxu0
    %952 = vdwg.mxu0
    %v953 = vmul.f32 %v945, 0.35355338
    %v954 = vmul.f32 %v950, 0.35355338
    %v955 = vadd.f32 %v953, %v217
    %v956 = vadd.f32 %v954, %v226
    %v957 = vsel %vm320, %v955, -inf
    %958 = vmax.xlane.f32.xlu0 %v957
    %v959 = vpop.xlane.xlu0 %958
    %v960 = vsel %vm320, %v956, -inf
    %961 = vmax.xlane.f32.xlu0 %v960
    %v962 = vpop.xlane.xlu0 %961
    %v963 = vsub.f32 %v955, %v959
    %v964 = vsub.f32 %v956, %v962
    %v965 = vmul.f32 %v963, 1.442695
    %v966 = vpow.pop %v965
    %v967 = vmul.f32 %v964, 1.442695
    %v968 = vpow.pop %v967
    %v969 = vsel %vm320, %v966, 0.0
    %970 = vadd.xlane.f32.xlu0 %v969
    %v971 = vpop.xlane.xlu0 %970
    %v972 = vsel %vm320, %v968, 0.0
    %973 = vadd.xlane.f32.xlu0 %v972
    %v974 = vpop.xlane.xlu0 %973
    %v975 = vrcp.pop %v971
    %v976 = vmul.f32 %v966, %v975
    %v977 = vrcp.pop %v974
    %v978 = vmul.f32 %v968, %v977
    %979 = vrot.lane.b32.xlu0 %v205, 40
    %v980 = vpop.permute.xlu0 %979
    %981 = vrot.lane.b32.xlu0 %v210, 40
    %v982 = vpop.permute.xlu0 %981
    %v986 = vsel %vm320, %v976, 0
    %v989 = vsel %vm320, %v978, 0
    %991 = vmatprep.subr.mxu0 0.0
    %992 = vmatpush1.msra.mxu0 0.0
    %993 = vmatprep.subr.mxu0 0.0
    %994 = vmatpush1.msra.mxu0 0.0
    %995 = vmatprep.subr.mxu0 0.0
    %996 = vmatpush1.msra.mxu0 0.0
    %997 = vmatprep.subr.mxu0 0.0
    %998 = vmatpush1.msra.mxu0 0.0
    %999 = vmatprep.subr.mxu0 0.0
    %1000 = vmatpush1.msra.mxu0 0.0
    %1001 = vmatprep.subr.mxu0 0.0
    %1002 = vmatpush1.msra.mxu0 0.0
    %1003 = vmatprep.subr.mxu0 0.0
    %1004 = vmatpush1.msra.mxu0 0.0
    %1005 = vmatprep.subr.mxu0 0.0
    %1006 = vmatpush1.msra.mxu0 0.0
    %1007 = vmatprep.subr.mxu0 0.0
    %1008 = vmatpush1.msra.mxu0 0.0
    %1009 = vmatprep.subr.mxu0 0.0
    %1010 = vmatpush1.msra.mxu0 0.0
    %1011 = vmatprep.subr.mxu0 0.0
    %1012 = vmatpush1.msra.mxu0 0.0
    %1013 = vmatprep.subr.mxu0 0.0
    %1014 = vmatpush1.msra.mxu0 0.0
    %1015 = vmatprep.subr.mxu0 0.0
    %1016 = vmatpush1.msra.mxu0 0.0
    %1017 = vmatprep.subr.mxu0 0.0
    %1018 = vmatpush1.msra.mxu0 0.0
    %1019 = vmatprep.subr.mxu0 0.0
    %1020 = vmatpush1.msra.mxu0 %v982
    %1021 = vmatprep.subr.mxu0 0.0
    %1022 = vmatpush1.msra.mxu0 %v980
    %1023 = vmatprep.subr.mxu0 0.0
    %1024 = vmatpush2.msra.mxu0 0.0
    %1025 = vmatprep.subr.mxu0 0.0
    %1026 = vmatpush2.msra.mxu0 0.0
    %1027 = vmatprep.subr.mxu0 0.0
    %1028 = vmatpush2.msra.mxu0 0.0
    %1029 = vmatprep.subr.mxu0 0.0
    %1030 = vmatpush2.msra.mxu0 0.0
    %1031 = vmatprep.subr.mxu0 0.0
    %1032 = vmatpush2.msra.mxu0 0.0
    %1033 = vmatprep.subr.mxu0 0.0
    %1034 = vmatpush2.msra.mxu0 0.0
    %1035 = vmatprep.subr.mxu0 0.0
    %1036 = vmatpush2.msra.mxu0 0.0
    %1037 = vmatprep.subr.mxu0 0.0
    %1038 = vmatpush2.msra.mxu0 0.0
    %1039 = vmatprep.subr.mxu0 0.0
    %1040 = vmatpush2.msra.mxu0 0.0
    %1041 = vmatprep.subr.mxu0 0.0
    %1042 = vmatpush2.msra.mxu0 0.0
    %1043 = vmatprep.subr.mxu0 0.0
    %1044 = vmatpush2.msra.mxu0 0.0
    %1045 = vmatprep.subr.mxu0 0.0
    %1046 = vmatpush2.msra.mxu0 0.0
    %1047 = vmatprep.subr.mxu0 0.0
    %1048 = vmatpush2.msra.mxu0 0.0
    %1049 = vmatprep.subr.mxu0 0.0
    %1050 = vmatpush2.msra.mxu0 0.0
    %1051 = vmatprep.subr.mxu0 0.0
    %1052 = vmatpush2.msra.mxu0 0.0
    %1053 = vmatprep.subr.mxu0 0.0
    %1054 = vmatpush2.msra.mxu0 0.0
    %1055 = vmatprep.mubr.f32.mxu0 0.0
    %1056 = vmatmul.mubr.f32.gmra.mxu0 %v986
    %v1057 = vpop.f32.mrf.mxu0
    %v1058 = vadd.f32 0.0, %v1057
    %v1059 = vpop.f32.mrf.mxu0
    %1060 = vmatprep.mubr.f32.mxu0 0.0
    %1061 = vmatmul.mubr.f32.gmra.mxu0 %v989
    %v1062 = vpop.f32.mrf.mxu0
    %v1063 = vadd.f32 0.0, %v1062
    %v1064 = vpop.f32.mrf.mxu0
    %1065 = vdwg.mxu0
    %1068 = vrot.lane.b32.xlu0 %v1058, 24
    %v1069 = vpop.permute.xlu0 %1068
    %1070 = vrot.lane.b32.xlu0 %v1063, 24
    %v1071 = vpop.permute.xlu0 %1070
    %vm1074 = vcmask 261312
    %1075 = vst.msk [vmem:[#allocation2] sm:$0xff] %vm1074, %v1069
    %1076 = vst.msk [vmem:[#allocation2 + $0x8] sm:$0xff] %vm1074, %v1071
    %v1077 = vld [vmem:[#allocation2] sm:$0xff]
    %v1078 = vld [vmem:[#allocation2 + $0x8] sm:$0xff]
    %v1079 = vld [vmem:[%s4] sm:$0xff]
    %v1080 = vld [vmem:[%s4 + $0x8] sm:$0xff]
    %v1081 = vld [vmem:[%s4 + $0x10] sm:$0xff]
    %v1082 = vld [vmem:[%s4 + $0x18] sm:$0xff]
    %v1083 = vld [vmem:[%s7 + $0x1] sm:$0x1]
    %v1084 = vlaneseq
    %v1085 = vshrl.u32 %v1084, 7
    %v1086 = vsub.s32 0, %v1085
    %v1087 = vrot.slane %v1083, %v1086
    %v1089 = vsel %vm75, %v1077, 0
    %v1092 = vsel %vm75, %v1078, 0
    %1094 = vmatprep.subr.mxu0 0.0
    %1095 = vmatpush1.msra.mxu0 0.0
    %1096 = vmatprep.subr.mxu0 0.0
    %1097 = vmatpush1.msra.mxu0 0.0
    %1098 = vmatprep.subr.mxu0 0.0
    %1099 = vmatpush1.msra.mxu0 0.0
    %1100 = vmatprep.subr.mxu0 0.0
    %1101 = vmatpush1.msra.mxu0 0.0
    %1102 = vmatprep.subr.mxu0 0.0
    %1103 = vmatpush1.msra.mxu0 0.0
    %1104 = vmatprep.subr.mxu0 0.0
    %1105 = vmatpush1.msra.mxu0 0.0
    %1106 = vmatprep.subr.mxu0 0.0
    %1107 = vmatpush1.msra.mxu0 0.0
    %1108 = vmatprep.subr.mxu0 0.0
    %1109 = vmatpush1.msra.mxu0 0.0
    %1110 = vmatprep.subr.mxu0 0.0
    %1111 = vmatpush1.msra.mxu0 0.0
    %1112 = vmatprep.subr.mxu0 0.0
    %1113 = vmatpush1.msra.mxu0 0.0
    %1114 = vmatprep.subr.mxu0 0.0
    %1115 = vmatpush1.msra.mxu0 0.0
    %1116 = vmatprep.subr.mxu0 0.0
    %1117 = vmatpush1.msra.mxu0 0.0
    %1118 = vmatprep.subr.mxu0 0.0
    %1119 = vmatpush1.msra.mxu0 %v1082
    %1120 = vmatprep.subr.mxu0 0.0
    %1121 = vmatpush1.msra.mxu0 %v1081
    %1122 = vmatprep.subr.mxu0 0.0
    %1123 = vmatpush1.msra.mxu0 %v1080
    %1124 = vmatprep.subr.mxu0 0.0
    %1125 = vmatpush1.msra.mxu0 %v1079
    %1126 = vmatprep.subr.mxu0 0.0
    %1127 = vmatpush2.msra.mxu0 0.0
    %1128 = vmatprep.subr.mxu0 0.0
    %1129 = vmatpush2.msra.mxu0 0.0
    %1130 = vmatprep.subr.mxu0 0.0
    %1131 = vmatpush2.msra.mxu0 0.0
    %1132 = vmatprep.subr.mxu0 0.0
    %1133 = vmatpush2.msra.mxu0 0.0
    %1134 = vmatprep.subr.mxu0 0.0
    %1135 = vmatpush2.msra.mxu0 0.0
    %1136 = vmatprep.subr.mxu0 0.0
    %1137 = vmatpush2.msra.mxu0 0.0
    %1138 = vmatprep.subr.mxu0 0.0
    %1139 = vmatpush2.msra.mxu0 0.0
    %1140 = vmatprep.subr.mxu0 0.0
    %1141 = vmatpush2.msra.mxu0 0.0
    %1142 = vmatprep.subr.mxu0 0.0
    %1143 = vmatpush2.msra.mxu0 0.0
    %1144 = vmatprep.subr.mxu0 0.0
    %1145 = vmatpush2.msra.mxu0 0.0
    %1146 = vmatprep.subr.mxu0 0.0
    %1147 = vmatpush2.msra.mxu0 0.0
    %1148 = vmatprep.subr.mxu0 0.0
    %1149 = vmatpush2.msra.mxu0 0.0
    %1150 = vmatprep.subr.mxu0 0.0
    %1151 = vmatpush2.msra.mxu0 0.0
    %1152 = vmatprep.subr.mxu0 0.0
    %1153 = vmatpush2.msra.mxu0 0.0
    %1154 = vmatprep.subr.mxu0 0.0
    %1155 = vmatpush2.msra.mxu0 0.0
    %1156 = vmatprep.subr.mxu0 0.0
    %1157 = vmatpush2.msra.mxu0 0.0
    %1158 = vmatprep.mubr.f32.mxu0 0.0
    %1159 = vmatmul.mubr.f32.gmra.mxu0 %v1089
    %v1160 = vpop.f32.mrf.mxu0
    %v1161 = vadd.f32 %v1087, %v1160
    %v1162 = vpop.f32.mrf.mxu0
    %1163 = vmatprep.mubr.f32.mxu0 0.0
    %1164 = vmatmul.mubr.f32.gmra.mxu0 %v1092
    %v1165 = vpop.f32.mrf.mxu0
    %v1166 = vadd.f32 %v1087, %v1165
    %v1167 = vpop.f32.mrf.mxu0
    %1168 = vdwg.mxu0
    %v1169 = vadd.f32 %v69, %v1161
    %v1170 = vadd.f32 %v70, %v1166
    %v1171 = vsel %vm75, %v1169, 0.0
    %1172 = vadd.xlane.f32.xlu0 %v1171
    %v1173 = vpop.xlane.xlu0 %1172
    %v1174 = vsel %vm75, %v1170, 0.0
    %1175 = vadd.xlane.f32.xlu0 %v1174
    %v1176 = vpop.xlane.xlu0 %1175
    %v1177 = vmul.f32 %v1173, %v82
    %v1178 = vmul.f32 %v1176, %v82
    %v1179 = vsub.f32 %v1169, %v1177
    %v1180 = vsub.f32 %v1170, %v1178
    %v1181 = vmul.f32 %v1179, %v1179
    %v1182 = vmul.f32 %v1180, %v1180
    %v1183 = vsel %vm75, %v1181, 0.0
    %1184 = vadd.xlane.f32.xlu0 %v1183
    %v1185 = vpop.xlane.xlu0 %1184
    %v1186 = vsel %vm75, %v1182, 0.0
    %1187 = vadd.xlane.f32.xlu0 %v1186
    %v1188 = vpop.xlane.xlu0 %1187
    %v1189 = vmul.f32 %v1185, 0.032258064
    %v1190 = vmul.f32 %v1188, 0.032258064
    %v1191 = vstv %s73
    %v1192 = vmul.f32 %v1191, %v1179
    %v1193 = vmul.f32 %v1191, %v1180
    %v1194 = vrsqrt.pop %v1189
    %v1195 = vmul.f32 %v1189, %v1194
    %vm1196 = vcmp.eq.f32.partialorder %v1189, inf
    %v1197 = vsel %vm1196, %v1189, %v1195
    %vm1198 = vcmp.eq.f32.partialorder %v1189, 0.0
    %v1199 = vand.u32 %v1189, 2147483648
    %v1200 = vsel %vm1198, %v1199, %v1197
    %v1201 = vrsqrt.pop %v1190
    %v1202 = vmul.f32 %v1190, %v1201
    %vm1203 = vcmp.eq.f32.partialorder %v1190, inf
    %v1204 = vsel %vm1203, %v1190, %v1202
    %vm1205 = vcmp.eq.f32.partialorder %v1190, 0.0
    %v1206 = vand.u32 %v1190, 2147483648
    %v1207 = vsel %vm1205, %v1206, %v1204
    %v1208 = vadd.f32 %v1200, 1e-06
    %v1209 = vadd.f32 %v1207, 1e-06
    %v1210 = vrcp.pop %v1208
    %v1211 = vmul.f32 %v1192, %v1210
    %v1212 = vrcp.pop %v1209
    %v1213 = vmul.f32 %v1193, %v1212
    %v1214 = vstv %s74
    %v1215 = vadd.f32 %v1211, %v1214
    %v1216 = vadd.f32 %v1213, %v1214
    %v1217 = vld [vmem:[%s5] sm:$0xff]
    %v1218 = vld [vmem:[%s5 + $0x8] sm:$0xff]
    %v1219 = vld [vmem:[%s5 + $0x10] sm:$0xff]
    %v1220 = vld [vmem:[%s5 + $0x18] sm:$0xff]
    %v1221 = vld [vmem:[%s7 + $0x2] sm:$0x1]
    %v1222 = vlaneseq
    %v1223 = vshrl.u32 %v1222, 7
    %v1224 = vsub.s32 0, %v1223
    %v1225 = vrot.slane %v1221, %v1224
    %v1227 = vsel %vm75, %v1215, 0
    %v1230 = vsel %vm75, %v1216, 0
    %1232 = vmatprep.subr.mxu0 0.0
    %1233 = vmatpush1.msra.mxu0 0.0
    %1234 = vmatprep.subr.mxu0 0.0
    %1235 = vmatpush1.msra.mxu0 0.0
    %1236 = vmatprep.subr.mxu0 0.0
    %1237 = vmatpush1.msra.mxu0 0.0
    %1238 = vmatprep.subr.mxu0 0.0
    %1239 = vmatpush1.msra.mxu0 0.0
    %1240 = vmatprep.subr.mxu0 0.0
    %1241 = vmatpush1.msra.mxu0 0.0
    %1242 = vmatprep.subr.mxu0 0.0
    %1243 = vmatpush1.msra.mxu0 0.0
    %1244 = vmatprep.subr.mxu0 0.0
    %1245 = vmatpush1.msra.mxu0 0.0
    %1246 = vmatprep.subr.mxu0 0.0
    %1247 = vmatpush1.msra.mxu0 0.0
    %1248 = vmatprep.subr.mxu0 0.0
    %1249 = vmatpush1.msra.mxu0 0.0
    %1250 = vmatprep.subr.mxu0 0.0
    %1251 = vmatpush1.msra.mxu0 0.0
    %1252 = vmatprep.subr.mxu0 0.0
    %1253 = vmatpush1.msra.mxu0 0.0
    %1254 = vmatprep.subr.mxu0 0.0
    %1255 = vmatpush1.msra.mxu0 0.0
    %1256 = vmatprep.subr.mxu0 0.0
    %1257 = vmatpush1.msra.mxu0 %v1220
    %1258 = vmatprep.subr.mxu0 0.0
    %1259 = vmatpush1.msra.mxu0 %v1219
    %1260 = vmatprep.subr.mxu0 0.0
    %1261 = vmatpush1.msra.mxu0 %v1218
    %1262 = vmatprep.subr.mxu0 0.0
    %1263 = vmatpush1.msra.mxu0 %v1217
    %1264 = vmatprep.subr.mxu0 0.0
    %1265 = vmatpush2.msra.mxu0 0.0
    %1266 = vmatprep.subr.mxu0 0.0
    %1267 = vmatpush2.msra.mxu0 0.0
    %1268 = vmatprep.subr.mxu0 0.0
    %1269 = vmatpush2.msra.mxu0 0.0
    %1270 = vmatprep.subr.mxu0 0.0
    %1271 = vmatpush2.msra.mxu0 0.0
    %1272 = vmatprep.subr.mxu0 0.0
    %1273 = vmatpush2.msra.mxu0 0.0
    %1274 = vmatprep.subr.mxu0 0.0
    %1275 = vmatpush2.msra.mxu0 0.0
    %1276 = vmatprep.subr.mxu0 0.0
    %1277 = vmatpush2.msra.mxu0 0.0
    %1278 = vmatprep.subr.mxu0 0.0
    %1279 = vmatpush2.msra.mxu0 0.0
    %1280 = vmatprep.subr.mxu0 0.0
    %1281 = vmatpush2.msra.mxu0 0.0
    %1282 = vmatprep.subr.mxu0 0.0
    %1283 = vmatpush2.msra.mxu0 0.0
    %1284 = vmatprep.subr.mxu0 0.0
    %1285 = vmatpush2.msra.mxu0 0.0
    %1286 = vmatprep.subr.mxu0 0.0
    %1287 = vmatpush2.msra.mxu0 0.0
    %1288 = vmatprep.subr.mxu0 0.0
    %1289 = vmatpush2.msra.mxu0 0.0
    %1290 = vmatprep.subr.mxu0 0.0
    %1291 = vmatpush2.msra.mxu0 0.0
    %1292 = vmatprep.subr.mxu0 0.0
    %1293 = vmatpush2.msra.mxu0 0.0
    %1294 = vmatprep.subr.mxu0 0.0
    %1295 = vmatpush2.msra.mxu0 0.0
    %1296 = vmatprep.mubr.f32.mxu0 0.0
    %1297 = vmatmul.mubr.f32.gmra.mxu0 %v1227
    %v1298 = vpop.f32.mrf.mxu0
    %v1299 = vadd.f32 %v1225, %v1298
    %v1300 = vpop.f32.mrf.mxu0
    %1301 = vmatprep.mubr.f32.mxu0 0.0
    %1302 = vmatmul.mubr.f32.gmra.mxu0 %v1230
    %v1303 = vpop.f32.mrf.mxu0
    %v1304 = vadd.f32 %v1225, %v1303
    %v1305 = vpop.f32.mrf.mxu0
    %1306 = vdwg.mxu0
    %v1307 = vmax.f32 %v1299, 0.0
    %v1308 = vmax.f32 %v1304, 0.0
    %v1309 = vld [vmem:[%s6] sm:$0xff]
    %v1310 = vld [vmem:[%s6 + $0x8] sm:$0xff]
    %v1311 = vld [vmem:[%s6 + $0x10] sm:$0xff]
    %v1312 = vld [vmem:[%s6 + $0x18] sm:$0xff]
    %v1313 = vld [vmem:[%s6 + $0x20] sm:$0xff]
    %v1314 = vld [vmem:[%s6 + $0x28] sm:$0xff]
    %v1315 = vld [vmem:[%s6 + $0x30] sm:$0xff]
    %v1316 = vld [vmem:[%s6 + $0x38] sm:$0xff]
    %v1317 = vld [vmem:[%s7 + $0x3] sm:$0x1]
    %v1318 = vlaneseq
    %v1319 = vshrl.u32 %v1318, 7
    %v1320 = vsub.s32 0, %v1319
    %v1321 = vrot.slane %v1317, %v1320
    %vm1322 = vcmask 523264
    %v1324 = vsel %vm1322, %v1307, 0
    %v1327 = vsel %vm1322, %v1308, 0
    %1329 = vmatprep.subr.mxu0 0.0
    %1330 = vmatpush1.msra.mxu0 0.0
    %1331 = vmatprep.subr.mxu0 0.0
    %1332 = vmatpush1.msra.mxu0 0.0
    %1333 = vmatprep.subr.mxu0 0.0
    %1334 = vmatpush1.msra.mxu0 0.0
    %1335 = vmatprep.subr.mxu0 0.0
    %1336 = vmatpush1.msra.mxu0 0.0
    %1337 = vmatprep.subr.mxu0 0.0
    %1338 = vmatpush1.msra.mxu0 0.0
    %1339 = vmatprep.subr.mxu0 0.0
    %1340 = vmatpush1.msra.mxu0 0.0
    %1341 = vmatprep.subr.mxu0 0.0
    %1342 = vmatpush1.msra.mxu0 0.0
    %1343 = vmatprep.subr.mxu0 0.0
    %1344 = vmatpush1.msra.mxu0 0.0
    %1345 = vmatprep.subr.mxu0 0.0
    %1346 = vmatpush1.msra.mxu0 %v1316
    %1347 = vmatprep.subr.mxu0 0.0
    %1348 = vmatpush1.msra.mxu0 %v1315
    %1349 = vmatprep.subr.mxu0 0.0
    %1350 = vmatpush1.msra.mxu0 %v1314
    %1351 = vmatprep.subr.mxu0 0.0
    %1352 = vmatpush1.msra.mxu0 %v1313
    %1353 = vmatprep.subr.mxu0 0.0
    %1354 = vmatpush1.msra.mxu0 %v1312
    %1355 = vmatprep.subr.mxu0 0.0
    %1356 = vmatpush1.msra.mxu0 %v1311
    %1357 = vmatprep.subr.mxu0 0.0
    %1358 = vmatpush1.msra.mxu0 %v1310
    %1359 = vmatprep.subr.mxu0 0.0
    %1360 = vmatpush1.msra.mxu0 %v1309
    %1361 = vmatprep.subr.mxu0 0.0
    %1362 = vmatpush2.msra.mxu0 0.0
    %1363 = vmatprep.subr.mxu0 0.0
    %1364 = vmatpush2.msra.mxu0 0.0
    %1365 = vmatprep.subr.mxu0 0.0
    %1366 = vmatpush2.msra.mxu0 0.0
    %1367 = vmatprep.subr.mxu0 0.0
    %1368 = vmatpush2.msra.mxu0 0.0
    %1369 = vmatprep.subr.mxu0 0.0
    %1370 = vmatpush2.msra.mxu0 0.0
    %1371 = vmatprep.subr.mxu0 0.0
    %1372 = vmatpush2.msra.mxu0 0.0
    %1373 = vmatprep.subr.mxu0 0.0
    %1374 = vmatpush2.msra.mxu0 0.0
    %1375 = vmatprep.subr.mxu0 0.0
    %1376 = vmatpush2.msra.mxu0 0.0
    %1377 = vmatprep.subr.mxu0 0.0
    %1378 = vmatpush2.msra.mxu0 0.0
    %1379 = vmatprep.subr.mxu0 0.0
    %1380 = vmatpush2.msra.mxu0 0.0
    %1381 = vmatprep.subr.mxu0 0.0
    %1382 = vmatpush2.msra.mxu0 0.0
    %1383 = vmatprep.subr.mxu0 0.0
    %1384 = vmatpush2.msra.mxu0 0.0
    %1385 = vmatprep.subr.mxu0 0.0
    %1386 = vmatpush2.msra.mxu0 0.0
    %1387 = vmatprep.subr.mxu0 0.0
    %1388 = vmatpush2.msra.mxu0 0.0
    %1389 = vmatprep.subr.mxu0 0.0
    %1390 = vmatpush2.msra.mxu0 0.0
    %1391 = vmatprep.subr.mxu0 0.0
    %1392 = vmatpush2.msra.mxu0 0.0
    %1393 = vmatprep.mubr.f32.mxu0 0.0
    %1394 = vmatmul.mubr.f32.gmra.mxu0 %v1324
    %v1395 = vpop.f32.mrf.mxu0
    %v1396 = vadd.f32 %v1321, %v1395
    %v1397 = vpop.f32.mrf.mxu0
    %1398 = vmatprep.mubr.f32.mxu0 0.0
    %1399 = vmatmul.mubr.f32.gmra.mxu0 %v1327
    %v1400 = vpop.f32.mrf.mxu0
    %v1401 = vadd.f32 %v1321, %v1400
    %v1402 = vpop.f32.mrf.mxu0
    %1403 = vdwg.mxu0
    %v1404 = vadd.f32 %v1169, %v1396
    %v1405 = vadd.f32 %v1170, %v1401
    %1406 = vst.msk [vmem:[#allocation10] sm:$0xff] %vm75, %v1404
    %1407 = vst.msk [vmem:[#allocation10 + $0x8] sm:$0xff] %vm75, %v1405
    // Predicated region
    $region46: #{tpu_custom_call.1} parent=1 // pred_check
      _
    $region47: #{tpu_custom_call.1} parent=1 // pred_check_branch
      %1409 = sbr.rel (0) target = $region49
    $region48: #{tpu_custom_call.1} parent=1 // pred_region
      %s1411 = ssub.s32 256, 256
      %1412 = vsyncadd [#allocation5], %s1411
      %s1413 = sshll.u32 [#allocation10], 4
      %s1414 = int_to_ptr.vmem [resolvable:$true] %s1413
      %1419 = dma.vmem_to_hbm [thread:$0]  %s1414, 256, %s8, [#allocation5], 128, 128, 8
    $region49: #{tpu_custom_call.1} parent=1 // pred_fallthru
      _
    // Predicated region
    $region50: #{tpu_custom_call.1} parent=1 // pred_check
      _
    $region51: #{tpu_custom_call.1} parent=1 // pred_check_branch
      %1421 = sbr.rel (0) target = $region53
    $region52: #{tpu_custom_call.1} parent=1 // pred_region
      %1422 = dma.done [#allocation5], 256
    $region53: #{tpu_custom_call.1} parent=1 // pred_fallthru
      _
    %1423 = vsyncpa [#allocation4], 1
    %1424 = vsyncpa [#allocation9], 1
    %1425 = vsyncpa [#allocation5], 1
    %1426 = vsyncpa [#allocation6], 1

</llo_original>
